<compile_context>
chip_gen: v5e
topology: v5e:2x2
jax: 0.10.0
libtpu: 0.0.40
codegen_flags: <defaults>
</compile_context>

<pallas_src>
import functools

import jax
import jax.numpy as jnp
import numpy as np
from jax.experimental import pallas as pl
from jax.experimental.pallas import tpu as pltpu


# --------------------------------------------------------------------------
# Kernel
# --------------------------------------------------------------------------
def basic_block_kernel(x_ref, w1_ref, w2_ref, out_ref, *, matmul_dtype):
    nb, c, seq_len = x_ref.shape

    # Fused weights (BN scale folded into taps, BN bias as trailing column).
    w1 = w1_ref[...]          # (C_out, 3*C_in + 1), matmul_dtype
    w2 = w2_ref[...]

    # Hoisted (loop-invariant) edge masks and the ones-row for the bias fold.
    lane = jax.lax.broadcasted_iota(jnp.int32, (1, seq_len), 1)
    not_first = lane != 0
    not_last = lane != (seq_len - 1)
    ones_row = jnp.ones((1, seq_len), matmul_dtype)

    def conv_bn(w, inp):
        # inp: (C, L) f32 for ONE sequence.  Zero-padded 3-tap conv + BN as a
        # single MXU matmul.  Shifts go through the XLU (pltpu.roll); the edge
        # mask implements the padding=1 zero boundary.
        x_m = jnp.where(not_first, pltpu.roll(inp, shift=1, axis=1), 0.0)
        x_p = jnp.where(not_last, pltpu.roll(inp, shift=seq_len - 1, axis=1),
                        0.0)
        stacked = jnp.concatenate(
            [x_m.astype(matmul_dtype), inp.astype(matmul_dtype),
             x_p.astype(matmul_dtype), ones_row],
            axis=0)                                   # (3C+1, L)
        return jnp.dot(w, stacked, preferred_element_type=jnp.float32)

    def body(b, carry):
        xb = x_ref[b].astype(jnp.float32)             # (C, L)
        out = jnp.maximum(conv_bn(w1, xb), 0.0)       # conv1 + BN1 + ReLU
        out = conv_bn(w2, out)                        # conv2 + BN2
        # TODO(synk): DropBlock1D(drop_prob=0.1, block_size=8) is identity in
        # eval mode; training-time stochastic block masking is not implemented.
        out = jnp.maximum(out + xb, 0.0)              # residual + final ReLU
        out_ref[b] = out.astype(out_ref.dtype)
        return carry

    # Per-step batch group loop; unroll short trip counts for LLO visibility.
    jax.lax.fori_loop(0, nb, body, 0, unroll=bool(nb <= 8))


# --------------------------------------------------------------------------
# Wrapper helpers
# --------------------------------------------------------------------------
def _fuse_conv_bn(w, gamma, beta, mean, var, eps, matmul_dtype):
    """(Co,Ci,3) conv weight + BN(running stats) -> (Co, 3*Ci+1) fused weight.

    Row layout matches the kernel's [x_{l-1}; x_l; x_{l+1}; 1] sublane
    stacking; the last column carries the full BN bias (beta - mean*scale).
    """
    co = w.shape[0]
    inv = gamma / jnp.sqrt(var + eps)                         # (Co,)
    taps = jnp.transpose(w, (0, 2, 1)).reshape(co, -1) * inv[:, None]
    bias = (beta - mean * inv)[:, None]
    return jnp.concatenate([taps, bias], axis=1).astype(matmul_dtype)


def _device_kind():
    try:
        return jax.devices()[0].device_kind.lower()
    except Exception:
        return "unknown"


def _generation_params():
    """(n_tensorcores_per_chip, vmem_working_budget_bytes, vmem_limit_bytes)."""
    kind = _device_kind()
    if "v7" in kind:                 # 2 TCs, 64 MiB VMEM per TC
        return 2, 12 << 20, 28 << 20
    if "v4" in kind or "v5p" in kind:  # megacore, conservative budget
        return 2, 12 << 20, 32 << 20
    if "v5e" in kind or "v5 lite" in kind or "v5lite" in kind:
        return 1, 12 << 20, 48 << 20
    if "v6" in kind:                 # single TC, 128 MiB VMEM
        return 1, 24 << 20, 64 << 20
    return 1, 12 << 20, 32 << 20     # unknown: stay conservative


def _pick_batch_per_step(N, C, L, *, vmem_budget_bytes, n_cores):
    """Largest divisor of N whose per-step working set fits the VMEM budget.

    On megacore chips (n_cores > 1) the number of grid steps is additionally
    kept a multiple of the core count so the 'parallel' axis shards evenly;
    on single-core chips the largest fitting group wins even if it means a
    single grid step.
    """
    def ws_bytes(nb):
        # double-buffered input+output blocks + per-element temporaries
        # (shifted copies, stacked (3C+1,L) operand, conv outputs) + weights.
        return 16 * nb * C * L * 4 + 14 * C * L * 4 + (64 << 10)

    divisors = [d for d in range(1, N + 1) if N % d == 0]
    best = None
    for d in divisors:
        if ws_bytes(d) > vmem_budget_bytes:
            continue
        if n_cores > 1 and (N // d) % n_cores != 0:
            continue
        best = d
    if best is not None:
        return best
    # Relax the megacore-evenness constraint if nothing satisfied it.
    for d in divisors:
        if ws_bytes(d) <= vmem_budget_bytes:
            best = d
    return best if best is not None else 1


# --------------------------------------------------------------------------
# Forward pass (eval mode / running BN stats, downsample=None, stride=1)
# --------------------------------------------------------------------------
def basic_block_forward(x, w1, g1, beta1, m1, v1, w2, g2, beta2, m2, v2,
                        eps=1e-5, batch_per_step=None,
                        matmul_dtype=jnp.float32):
    N, C_in, L = x.shape
    C_out = w1.shape[0]
    assert C_out == C_in, "downsample=None requires inplanes == planes"
    K = 3 * C_in + 1

    w1f = _fuse_conv_bn(w1, g1, beta1, m1, v1, eps, matmul_dtype)
    w2f = _fuse_conv_bn(w2, g2, beta2, m2, v2, eps, matmul_dtype)

    n_cores, budget, vmem_limit = _generation_params()
    if batch_per_step is None:
        batch_per_step = _pick_batch_per_step(
            N, C_in, L, vmem_budget_bytes=budget, n_cores=n_cores)
    assert N % batch_per_step == 0
    n_steps = N // batch_per_step

    kernel = functools.partial(basic_block_kernel, matmul_dtype=matmul_dtype)

    return pl.pallas_call(
        kernel,
        out_shape=jax.ShapeDtypeStruct((N, C_out, L), x.dtype),
        grid_spec=pltpu.PrefetchScalarGridSpec(
            num_scalar_prefetch=0,
            grid=(n_steps,),
            in_specs=[
                # Native (N, C, L) layout: last two block dims equal the full
                # array dims, so the (8,128) BlockSpec rule is satisfied for
                # any C, L.  No HBM transpose anywhere.
                pl.BlockSpec((batch_per_step, C_in, L), lambda i: (i, 0, 0)),
                pl.BlockSpec((C_out, K), lambda i: (0, 0)),
                pl.BlockSpec((C_out, K), lambda i: (0, 0)),
            ],
            out_specs=pl.BlockSpec((batch_per_step, C_out, L),
                                   lambda i: (i, 0, 0)),
        ),
        compiler_params=pltpu.CompilerParams(
            dimension_semantics=("parallel",),
            vmem_limit_bytes=vmem_limit),
    )(x, w1f, w2f)


# --------------------------------------------------------------------------
# Pure-JAX reference
# --------------------------------------------------------------------------
def ref_forward(x, w1, g1, beta1, m1, v1, w2, g2, beta2, m2, v2, eps=1e-5):
    def conv3(w, inp):                       # w: (Co,Ci,3), inp: (N,Ci,L)
        L = inp.shape[-1]
        xp = jnp.pad(inp, ((0, 0), (0, 0), (1, 1)))
        return sum(jnp.einsum('oc,ncl->nol', w[:, :, k], xp[:, :, k:k + L])
                   for k in range(3))

    def bn(y, g, b, m, v):
        inv = (g / jnp.sqrt(v + eps)).reshape(1, -1, 1)
        return y * inv + (b - m * g / jnp.sqrt(v + eps)).reshape(1, -1, 1)

    out = jnp.maximum(bn(conv3(w1, x), g1, beta1, m1, v1), 0.0)
    out = bn(conv3(w2, out), g2, beta2, m2, v2)
    out = out + x                             # DropBlock identity in eval
    return jnp.maximum(out, 0.0)


# --------------------------------------------------------------------------
# Test
# --------------------------------------------------------------------------
if __name__ == "__main__":
    # Small but lane-dense shapes: 8 seqs of length 128 (full 128-lane vregs),
    # 16 channels.  On megacore chips the picker produces an even step count;
    # on single-TC chips it packs everything into one large step.
    N, C, L = 8, 16, 128
    key = jax.random.PRNGKey(0)
    ks = jax.random.split(key, 12)

    x = jax.random.normal(ks[0], (N, C, L), jnp.float32)

    # conv3x1 weights: (out_planes, in_planes, 3), no bias
    w1 = 0.2 * jax.random.normal(ks[1], (C, C, 3), jnp.float32)
    w2 = 0.2 * jax.random.normal(ks[2], (C, C, 3), jnp.float32)

    # BatchNorm1d params (inference: running stats)
    g1 = 1.0 + 0.1 * jax.random.normal(ks[3], (C,), jnp.float32)
    beta1 = 0.1 * jax.random.normal(ks[4], (C,), jnp.float32)
    m1 = 0.1 * jax.random.normal(ks[5], (C,), jnp.float32)
    v1 = jnp.abs(jax.random.normal(ks[6], (C,), jnp.float32)) + 0.5

    g2 = 1.0 + 0.1 * jax.random.normal(ks[7], (C,), jnp.float32)
    beta2 = 0.1 * jax.random.normal(ks[8], (C,), jnp.float32)
    m2 = 0.1 * jax.random.normal(ks[9], (C,), jnp.float32)
    v2 = jnp.abs(jax.random.normal(ks[10], (C,), jnp.float32)) + 0.5

    ref = ref_forward(x, w1, g1, beta1, m1, v1, w2, g2, beta2, m2, v2)

    # f32 MXU operands: tight check against the f32 reference.
    out = basic_block_forward(x, w1, g1, beta1, m1, v1,
                              w2, g2, beta2, m2, v2,
                              matmul_dtype=jnp.float32)
    out = jax.block_until_ready(out)
    np.testing.assert_allclose(np.asarray(out), np.asarray(ref),
                               rtol=1e-3, atol=1e-3)

    # bf16 MXU operands (recommended on v6e/v7x); accumulation stays f32,
    # elementwise math stays f32, so only a looser tolerance is needed.
    out_bf16 = basic_block_forward(x, w1, g1, beta1, m1, v1,
                                   w2, g2, beta2, m2, v2,
                                   matmul_dtype=jnp.bfloat16)
    out_bf16 = jax.block_until_ready(out_bf16)
    np.testing.assert_allclose(np.asarray(out_bf16), np.asarray(ref),
                               rtol=5e-2, atol=5e-2)

    print("KERNEL_OK")
</pallas_src>

<mosaic_0001>
module attributes {stable_mosaic.version = 11 : i64} {
  func.func @basic_block_kernel(%arg0: i32, %arg1: memref<8x16x128xf32, #tpu.memory_space<vmem>>, %arg2: memref<16x49xf32, #tpu.memory_space<vmem>>, %arg3: memref<16x49xf32, #tpu.memory_space<vmem>>, %arg4: memref<8x16x128xf32, #tpu.memory_space<vmem>>) attributes {dimension_semantics = [#tpu.dimension_semantics<parallel>], iteration_bounds = array<i64: 1>, scalar_prefetch = 0 : i64, scratch_operands = 0 : i64, tpu.core_type = #tpu.core_type<tc>, window_params = [{transform_indices = @transform_0, window_bounds = array<i64: 8, 16, 128>}, {pipeline_mode = #tpu.pipeline_mode<synchronous>, transform_indices = @transform_1, window_bounds = array<i64: 16, 49>}, {pipeline_mode = #tpu.pipeline_mode<synchronous>, transform_indices = @transform_2, window_bounds = array<i64: 16, 49>}, {transform_indices = @transform_3, window_bounds = array<i64: 8, 16, 128>}]} {
    %c0 = arith.constant 0 : index
    %c0_0 = arith.constant 0 : index
    %0 = vector.load %arg2[%c0, %c0_0] : memref<16x49xf32, #tpu.memory_space<vmem>>, vector<16x49xf32>
    %c0_1 = arith.constant 0 : index
    %c0_2 = arith.constant 0 : index
    %1 = vector.load %arg3[%c0_1, %c0_2] : memref<16x49xf32, #tpu.memory_space<vmem>>, vector<16x49xf32>
    %2 = tpu.iota {dimensions = array<i32: 1>} : vector<1x128xi32>
    %c0_i32 = arith.constant 0 : i32
    %3 = vector.broadcast %c0_i32 : i32 to vector<1x128xi32>
    %4 = arith.cmpi ne, %2, %3 : vector<1x128xi32>
    %c127_i32 = arith.constant 127 : i32
    %5 = vector.broadcast %c127_i32 : i32 to vector<1x128xi32>
    %6 = arith.cmpi ne, %2, %5 : vector<1x128xi32>
    %cst = arith.constant 1.000000e+00 : f32
    %7 = vector.broadcast %cst : f32 to vector<1x128xf32>
    %c0_i32_3 = arith.constant 0 : i32
    %8 = arith.index_cast %c0_i32_3 : i32 to index
    %c0_4 = arith.constant 0 : index
    %c0_5 = arith.constant 0 : index
    %9 = vector.load %arg1[%8, %c0_4, %c0_5] : memref<8x16x128xf32, #tpu.memory_space<vmem>>, vector<1x16x128xf32>
    %10 = vector.shape_cast %9 : vector<1x16x128xf32> to vector<16x128xf32>
    %c1_i32 = arith.constant 1 : i32
    %11 = tpu.dynamic_rotate %10 by %c1_i32 dim 1 : vector<16x128xf32>, i32 -> vector<16x128xf32>
    %cst_6 = arith.constant 0.000000e+00 : f32
    %12 = vector.shape_cast %4 : vector<1x128xi1> to vector<1x128xi1>
    %13 = vector.broadcast %12 : vector<1x128xi1> to vector<16x128xi1>
    %14 = vector.broadcast %cst_6 : f32 to vector<16x128xf32>
    %15 = arith.select %13, %11, %14 : vector<16x128xi1>, vector<16x128xf32>
    %c127_i32_7 = arith.constant 127 : i32
    %16 = tpu.dynamic_rotate %10 by %c127_i32_7 dim 1 : vector<16x128xf32>, i32 -> vector<16x128xf32>
    %cst_8 = arith.constant 0.000000e+00 : f32
    %17 = vector.shape_cast %6 : vector<1x128xi1> to vector<1x128xi1>
    %18 = vector.broadcast %17 : vector<1x128xi1> to vector<16x128xi1>
    %19 = vector.broadcast %cst_8 : f32 to vector<16x128xf32>
    %20 = arith.select %18, %16, %19 : vector<16x128xi1>, vector<16x128xf32>
    %21 = tpu.concatenate %15, %10, %20, %7 in 0 : vector<16x128xf32>, vector<16x128xf32>, vector<16x128xf32>, vector<1x128xf32> -> vector<49x128xf32>
    %cst_9 = arith.constant dense<0.000000e+00> : vector<16x128xf32>
    %22 = tpu.matmul %0, %21, %cst_9 {dimension_numbers = #tpu.dot_dimension_numbers<[1], [0], [0], [1], [0, 0, 1, 1], [], []>} : vector<16x49xf32>, vector<49x128xf32>, vector<16x128xf32> -> vector<16x128xf32>
    %cst_10 = arith.constant 0.000000e+00 : f32
    %23 = vector.broadcast %cst_10 : f32 to vector<16x128xf32>
    %24 = arith.maximumf %22, %23 : vector<16x128xf32>
    %c1_i32_11 = arith.constant 1 : i32
    %25 = tpu.dynamic_rotate %24 by %c1_i32_11 dim 1 : vector<16x128xf32>, i32 -> vector<16x128xf32>
    %cst_12 = arith.constant 0.000000e+00 : f32
    %26 = vector.shape_cast %4 : vector<1x128xi1> to vector<1x128xi1>
    %27 = vector.broadcast %26 : vector<1x128xi1> to vector<16x128xi1>
    %28 = vector.broadcast %cst_12 : f32 to vector<16x128xf32>
    %29 = arith.select %27, %25, %28 : vector<16x128xi1>, vector<16x128xf32>
    %c127_i32_13 = arith.constant 127 : i32
    %30 = tpu.dynamic_rotate %24 by %c127_i32_13 dim 1 : vector<16x128xf32>, i32 -> vector<16x128xf32>
    %cst_14 = arith.constant 0.000000e+00 : f32
    %31 = vector.shape_cast %6 : vector<1x128xi1> to vector<1x128xi1>
    %32 = vector.broadcast %31 : vector<1x128xi1> to vector<16x128xi1>
    %33 = vector.broadcast %cst_14 : f32 to vector<16x128xf32>
    %34 = arith.select %32, %30, %33 : vector<16x128xi1>, vector<16x128xf32>
    %35 = tpu.concatenate %29, %24, %34, %7 in 0 : vector<16x128xf32>, vector<16x128xf32>, vector<16x128xf32>, vector<1x128xf32> -> vector<49x128xf32>
    %cst_15 = arith.constant dense<0.000000e+00> : vector<16x128xf32>
    %36 = tpu.matmul %1, %35, %cst_15 {dimension_numbers = #tpu.dot_dimension_numbers<[1], [0], [0], [1], [0, 0, 1, 1], [], []>} : vector<16x49xf32>, vector<49x128xf32>, vector<16x128xf32> -> vector<16x128xf32>
    %37 = arith.addf %36, %10 : vector<16x128xf32>
    %cst_16 = arith.constant 0.000000e+00 : f32
    %38 = vector.broadcast %cst_16 : f32 to vector<16x128xf32>
    %39 = arith.maximumf %37, %38 : vector<16x128xf32>
    %40 = arith.index_cast %c0_i32_3 : i32 to index
    %c0_17 = arith.constant 0 : index
    %c0_18 = arith.constant 0 : index
    %41 = vector.load %arg4[%40, %c0_17, %c0_18] : memref<8x16x128xf32, #tpu.memory_space<vmem>>, vector<1x16x128xf32>
    %42 = vector.shape_cast %41 : vector<1x16x128xf32> to vector<16x128xf32>
    %43 = vector.shape_cast %39 : vector<16x128xf32> to vector<1x16x128xf32>
    tpu.vector_store %arg4[%40, %c0_17, %c0_18], %43 {strides = array<i32>} : memref<8x16x128xf32, #tpu.memory_space<vmem>>, vector<1x16x128xf32>,
    %c1_i32_19 = arith.constant 1 : i32
    %44 = arith.index_cast %c1_i32_19 : i32 to index
    %c0_20 = arith.constant 0 : index
    %c0_21 = arith.constant 0 : index
    %45 = vector.load %arg1[%44, %c0_20, %c0_21] : memref<8x16x128xf32, #tpu.memory_space<vmem>>, vector<1x16x128xf32>
    %46 = vector.shape_cast %45 : vector<1x16x128xf32> to vector<16x128xf32>
    %c1_i32_22 = arith.constant 1 : i32
    %47 = tpu.dynamic_rotate %46 by %c1_i32_22 dim 1 : vector<16x128xf32>, i32 -> vector<16x128xf32>
    %cst_23 = arith.constant 0.000000e+00 : f32
    %48 = vector.shape_cast %4 : vector<1x128xi1> to vector<1x128xi1>
    %49 = vector.broadcast %48 : vector<1x128xi1> to vector<16x128xi1>
    %50 = vector.broadcast %cst_23 : f32 to vector<16x128xf32>
    %51 = arith.select %49, %47, %50 : vector<16x128xi1>, vector<16x128xf32>
    %c127_i32_24 = arith.constant 127 : i32
    %52 = tpu.dynamic_rotate %46 by %c127_i32_24 dim 1 : vector<16x128xf32>, i32 -> vector<16x128xf32>
    %cst_25 = arith.constant 0.000000e+00 : f32
    %53 = vector.shape_cast %6 : vector<1x128xi1> to vector<1x128xi1>
    %54 = vector.broadcast %53 : vector<1x128xi1> to vector<16x128xi1>
    %55 = vector.broadcast %cst_25 : f32 to vector<16x128xf32>
    %56 = arith.select %54, %52, %55 : vector<16x128xi1>, vector<16x128xf32>
    %57 = tpu.concatenate %51, %46, %56, %7 in 0 : vector<16x128xf32>, vector<16x128xf32>, vector<16x128xf32>, vector<1x128xf32> -> vector<49x128xf32>
    %cst_26 = arith.constant dense<0.000000e+00> : vector<16x128xf32>
    %58 = tpu.matmul %0, %57, %cst_26 {dimension_numbers = #tpu.dot_dimension_numbers<[1], [0], [0], [1], [0, 0, 1, 1], [], []>} : vector<16x49xf32>, vector<49x128xf32>, vector<16x128xf32> -> vector<16x128xf32>
    %cst_27 = arith.constant 0.000000e+00 : f32
    %59 = vector.broadcast %cst_27 : f32 to vector<16x128xf32>
    %60 = arith.maximumf %58, %59 : vector<16x128xf32>
    %c1_i32_28 = arith.constant 1 : i32
    %61 = tpu.dynamic_rotate %60 by %c1_i32_28 dim 1 : vector<16x128xf32>, i32 -> vector<16x128xf32>
    %cst_29 = arith.constant 0.000000e+00 : f32
    %62 = vector.shape_cast %4 : vector<1x128xi1> to vector<1x128xi1>
    %63 = vector.broadcast %62 : vector<1x128xi1> to vector<16x128xi1>
    %64 = vector.broadcast %cst_29 : f32 to vector<16x128xf32>
    %65 = arith.select %63, %61, %64 : vector<16x128xi1>, vector<16x128xf32>
    %c127_i32_30 = arith.constant 127 : i32
    %66 = tpu.dynamic_rotate %60 by %c127_i32_30 dim 1 : vector<16x128xf32>, i32 -> vector<16x128xf32>
    %cst_31 = arith.constant 0.000000e+00 : f32
    %67 = vector.shape_cast %6 : vector<1x128xi1> to vector<1x128xi1>
    %68 = vector.broadcast %67 : vector<1x128xi1> to vector<16x128xi1>
    %69 = vector.broadcast %cst_31 : f32 to vector<16x128xf32>
    %70 = arith.select %68, %66, %69 : vector<16x128xi1>, vector<16x128xf32>
    %71 = tpu.concatenate %65, %60, %70, %7 in 0 : vector<16x128xf32>, vector<16x128xf32>, vector<16x128xf32>, vector<1x128xf32> -> vector<49x128xf32>
    %cst_32 = arith.constant dense<0.000000e+00> : vector<16x128xf32>
    %72 = tpu.matmul %1, %71, %cst_32 {dimension_numbers = #tpu.dot_dimension_numbers<[1], [0], [0], [1], [0, 0, 1, 1], [], []>} : vector<16x49xf32>, vector<49x128xf32>, vector<16x128xf32> -> vector<16x128xf32>
    %73 = arith.addf %72, %46 : vector<16x128xf32>
    %cst_33 = arith.constant 0.000000e+00 : f32
    %74 = vector.broadcast %cst_33 : f32 to vector<16x128xf32>
    %75 = arith.maximumf %73, %74 : vector<16x128xf32>
    %76 = arith.index_cast %c1_i32_19 : i32 to index
    %c0_34 = arith.constant 0 : index
    %c0_35 = arith.constant 0 : index
    %77 = vector.load %arg4[%76, %c0_34, %c0_35] : memref<8x16x128xf32, #tpu.memory_space<vmem>>, vector<1x16x128xf32>
    %78 = vector.shape_cast %77 : vector<1x16x128xf32> to vector<16x128xf32>
    %79 = vector.shape_cast %75 : vector<16x128xf32> to vector<1x16x128xf32>
    tpu.vector_store %arg4[%76, %c0_34, %c0_35], %79 {strides = array<i32>} : memref<8x16x128xf32, #tpu.memory_space<vmem>>, vector<1x16x128xf32>,
    %c2_i32 = arith.constant 2 : i32
    %80 = arith.index_cast %c2_i32 : i32 to index
    %c0_36 = arith.constant 0 : index
    %c0_37 = arith.constant 0 : index
    %81 = vector.load %arg1[%80, %c0_36, %c0_37] : memref<8x16x128xf32, #tpu.memory_space<vmem>>, vector<1x16x128xf32>
    %82 = vector.shape_cast %81 : vector<1x16x128xf32> to vector<16x128xf32>
    %c1_i32_38 = arith.constant 1 : i32
    %83 = tpu.dynamic_rotate %82 by %c1_i32_38 dim 1 : vector<16x128xf32>, i32 -> vector<16x128xf32>
    %cst_39 = arith.constant 0.000000e+00 : f32
    %84 = vector.shape_cast %4 : vector<1x128xi1> to vector<1x128xi1>
    %85 = vector.broadcast %84 : vector<1x128xi1> to vector<16x128xi1>
    %86 = vector.broadcast %cst_39 : f32 to vector<16x128xf32>
    %87 = arith.select %85, %83, %86 : vector<16x128xi1>, vector<16x128xf32>
    %c127_i32_40 = arith.constant 127 : i32
    %88 = tpu.dynamic_rotate %82 by %c127_i32_40 dim 1 : vector<16x128xf32>, i32 -> vector<16x128xf32>
    %cst_41 = arith.constant 0.000000e+00 : f32
    %89 = vector.shape_cast %6 : vector<1x128xi1> to vector<1x128xi1>
    %90 = vector.broadcast %89 : vector<1x128xi1> to vector<16x128xi1>
    %91 = vector.broadcast %cst_41 : f32 to vector<16x128xf32>
    %92 = arith.select %90, %88, %91 : vector<16x128xi1>, vector<16x128xf32>
    %93 = tpu.concatenate %87, %82, %92, %7 in 0 : vector<16x128xf32>, vector<16x128xf32>, vector<16x128xf32>, vector<1x128xf32> -> vector<49x128xf32>
    %cst_42 = arith.constant dense<0.000000e+00> : vector<16x128xf32>
    %94 = tpu.matmul %0, %93, %cst_42 {dimension_numbers = #tpu.dot_dimension_numbers<[1], [0], [0], [1], [0, 0, 1, 1], [], []>} : vector<16x49xf32>, vector<49x128xf32>, vector<16x128xf32> -> vector<16x128xf32>
    %cst_43 = arith.constant 0.000000e+00 : f32
    %95 = vector.broadcast %cst_43 : f32 to vector<16x128xf32>
    %96 = arith.maximumf %94, %95 : vector<16x128xf32>
    %c1_i32_44 = arith.constant 1 : i32
    %97 = tpu.dynamic_rotate %96 by %c1_i32_44 dim 1 : vector<16x128xf32>, i32 -> vector<16x128xf32>
    %cst_45 = arith.constant 0.000000e+00 : f32
    %98 = vector.shape_cast %4 : vector<1x128xi1> to vector<1x128xi1>
    %99 = vector.broadcast %98 : vector<1x128xi1> to vector<16x128xi1>
    %100 = vector.broadcast %cst_45 : f32 to vector<16x128xf32>
    %101 = arith.select %99, %97, %100 : vector<16x128xi1>, vector<16x128xf32>
    %c127_i32_46 = arith.constant 127 : i32
    %102 = tpu.dynamic_rotate %96 by %c127_i32_46 dim 1 : vector<16x128xf32>, i32 -> vector<16x128xf32>
    %cst_47 = arith.constant 0.000000e+00 : f32
    %103 = vector.shape_cast %6 : vector<1x128xi1> to vector<1x128xi1>
    %104 = vector.broadcast %103 : vector<1x128xi1> to vector<16x128xi1>
    %105 = vector.broadcast %cst_47 : f32 to vector<16x128xf32>
    %106 = arith.select %104, %102, %105 : vector<16x128xi1>, vector<16x128xf32>
    %107 = tpu.concatenate %101, %96, %106, %7 in 0 : vector<16x128xf32>, vector<16x128xf32>, vector<16x128xf32>, vector<1x128xf32> -> vector<49x128xf32>
    %cst_48 = arith.constant dense<0.000000e+00> : vector<16x128xf32>
    %108 = tpu.matmul %1, %107, %cst_48 {dimension_numbers = #tpu.dot_dimension_numbers<[1], [0], [0], [1], [0, 0, 1, 1], [], []>} : vector<16x49xf32>, vector<49x128xf32>, vector<16x128xf32> -> vector<16x128xf32>
    %109 = arith.addf %108, %82 : vector<16x128xf32>
    %cst_49 = arith.constant 0.000000e+00 : f32
    %110 = vector.broadcast %cst_49 : f32 to vector<16x128xf32>
    %111 = arith.maximumf %109, %110 : vector<16x128xf32>
    %112 = arith.index_cast %c2_i32 : i32 to index
    %c0_50 = arith.constant 0 : index
    %c0_51 = arith.constant 0 : index
    %113 = vector.load %arg4[%112, %c0_50, %c0_51] : memref<8x16x128xf32, #tpu.memory_space<vmem>>, vector<1x16x128xf32>
    %114 = vector.shape_cast %113 : vector<1x16x128xf32> to vector<16x128xf32>
    %115 = vector.shape_cast %111 : vector<16x128xf32> to vector<1x16x128xf32>
    tpu.vector_store %arg4[%112, %c0_50, %c0_51], %115 {strides = array<i32>} : memref<8x16x128xf32, #tpu.memory_space<vmem>>, vector<1x16x128xf32>,
    %c3_i32 = arith.constant 3 : i32
    %116 = arith.index_cast %c3_i32 : i32 to index
    %c0_52 = arith.constant 0 : index
    %c0_53 = arith.constant 0 : index
    %117 = vector.load %arg1[%116, %c0_52, %c0_53] : memref<8x16x128xf32, #tpu.memory_space<vmem>>, vector<1x16x128xf32>
    %118 = vector.shape_cast %117 : vector<1x16x128xf32> to vector<16x128xf32>
    %c1_i32_54 = arith.constant 1 : i32
    %119 = tpu.dynamic_rotate %118 by %c1_i32_54 dim 1 : vector<16x128xf32>, i32 -> vector<16x128xf32>
    %cst_55 = arith.constant 0.000000e+00 : f32
    %120 = vector.shape_cast %4 : vector<1x128xi1> to vector<1x128xi1>
    %121 = vector.broadcast %120 : vector<1x128xi1> to vector<16x128xi1>
    %122 = vector.broadcast %cst_55 : f32 to vector<16x128xf32>
    %123 = arith.select %121, %119, %122 : vector<16x128xi1>, vector<16x128xf32>
    %c127_i32_56 = arith.constant 127 : i32
    %124 = tpu.dynamic_rotate %118 by %c127_i32_56 dim 1 : vector<16x128xf32>, i32 -> vector<16x128xf32>
    %cst_57 = arith.constant 0.000000e+00 : f32
    %125 = vector.shape_cast %6 : vector<1x128xi1> to vector<1x128xi1>
    %126 = vector.broadcast %125 : vector<1x128xi1> to vector<16x128xi1>
    %127 = vector.broadcast %cst_57 : f32 to vector<16x128xf32>
    %128 = arith.select %126, %124, %127 : vector<16x128xi1>, vector<16x128xf32>
    %129 = tpu.concatenate %123, %118, %128, %7 in 0 : vector<16x128xf32>, vector<16x128xf32>, vector<16x128xf32>, vector<1x128xf32> -> vector<49x128xf32>
    %cst_58 = arith.constant dense<0.000000e+00> : vector<16x128xf32>
    %130 = tpu.matmul %0, %129, %cst_58 {dimension_numbers = #tpu.dot_dimension_numbers<[1], [0], [0], [1], [0, 0, 1, 1], [], []>} : vector<16x49xf32>, vector<49x128xf32>, vector<16x128xf32> -> vector<16x128xf32>
    %cst_59 = arith.constant 0.000000e+00 : f32
    %131 = vector.broadcast %cst_59 : f32 to vector<16x128xf32>
    %132 = arith.maximumf %130, %131 : vector<16x128xf32>
    %c1_i32_60 = arith.constant 1 : i32
    %133 = tpu.dynamic_rotate %132 by %c1_i32_60 dim 1 : vector<16x128xf32>, i32 -> vector<16x128xf32>
    %cst_61 = arith.constant 0.000000e+00 : f32
    %134 = vector.shape_cast %4 : vector<1x128xi1> to vector<1x128xi1>
    %135 = vector.broadcast %134 : vector<1x128xi1> to vector<16x128xi1>
    %136 = vector.broadcast %cst_61 : f32 to vector<16x128xf32>
    %137 = arith.select %135, %133, %136 : vector<16x128xi1>, vector<16x128xf32>
    %c127_i32_62 = arith.constant 127 : i32
    %138 = tpu.dynamic_rotate %132 by %c127_i32_62 dim 1 : vector<16x128xf32>, i32 -> vector<16x128xf32>
    %cst_63 = arith.constant 0.000000e+00 : f32
    %139 = vector.shape_cast %6 : vector<1x128xi1> to vector<1x128xi1>
    %140 = vector.broadcast %139 : vector<1x128xi1> to vector<16x128xi1>
    %141 = vector.broadcast %cst_63 : f32 to vector<16x128xf32>
    %142 = arith.select %140, %138, %141 : vector<16x128xi1>, vector<16x128xf32>
    %143 = tpu.concatenate %137, %132, %142, %7 in 0 : vector<16x128xf32>, vector<16x128xf32>, vector<16x128xf32>, vector<1x128xf32> -> vector<49x128xf32>
    %cst_64 = arith.constant dense<0.000000e+00> : vector<16x128xf32>
    %144 = tpu.matmul %1, %143, %cst_64 {dimension_numbers = #tpu.dot_dimension_numbers<[1], [0], [0], [1], [0, 0, 1, 1], [], []>} : vector<16x49xf32>, vector<49x128xf32>, vector<16x128xf32> -> vector<16x128xf32>
    %145 = arith.addf %144, %118 : vector<16x128xf32>
    %cst_65 = arith.constant 0.000000e+00 : f32
    %146 = vector.broadcast %cst_65 : f32 to vector<16x128xf32>
    %147 = arith.maximumf %145, %146 : vector<16x128xf32>
    %148 = arith.index_cast %c3_i32 : i32 to index
    %c0_66 = arith.constant 0 : index
    %c0_67 = arith.constant 0 : index
    %149 = vector.load %arg4[%148, %c0_66, %c0_67] : memref<8x16x128xf32, #tpu.memory_space<vmem>>, vector<1x16x128xf32>
    %150 = vector.shape_cast %149 : vector<1x16x128xf32> to vector<16x128xf32>
    %151 = vector.shape_cast %147 : vector<16x128xf32> to vector<1x16x128xf32>
    tpu.vector_store %arg4[%148, %c0_66, %c0_67], %151 {strides = array<i32>} : memref<8x16x128xf32, #tpu.memory_space<vmem>>, vector<1x16x128xf32>,
    %c4_i32 = arith.constant 4 : i32
    %152 = arith.index_cast %c4_i32 : i32 to index
    %c0_68 = arith.constant 0 : index
    %c0_69 = arith.constant 0 : index
    %153 = vector.load %arg1[%152, %c0_68, %c0_69] : memref<8x16x128xf32, #tpu.memory_space<vmem>>, vector<1x16x128xf32>
    %154 = vector.shape_cast %153 : vector<1x16x128xf32> to vector<16x128xf32>
    %c1_i32_70 = arith.constant 1 : i32
    %155 = tpu.dynamic_rotate %154 by %c1_i32_70 dim 1 : vector<16x128xf32>, i32 -> vector<16x128xf32>
    %cst_71 = arith.constant 0.000000e+00 : f32
    %156 = vector.shape_cast %4 : vector<1x128xi1> to vector<1x128xi1>
    %157 = vector.broadcast %156 : vector<1x128xi1> to vector<16x128xi1>
    %158 = vector.broadcast %cst_71 : f32 to vector<16x128xf32>
    %159 = arith.select %157, %155, %158 : vector<16x128xi1>, vector<16x128xf32>
    %c127_i32_72 = arith.constant 127 : i32
    %160 = tpu.dynamic_rotate %154 by %c127_i32_72 dim 1 : vector<16x128xf32>, i32 -> vector<16x128xf32>
    %cst_73 = arith.constant 0.000000e+00 : f32
    %161 = vector.shape_cast %6 : vector<1x128xi1> to vector<1x128xi1>
    %162 = vector.broadcast %161 : vector<1x128xi1> to vector<16x128xi1>
    %163 = vector.broadcast %cst_73 : f32 to vector<16x128xf32>
    %164 = arith.select %162, %160, %163 : vector<16x128xi1>, vector<16x128xf32>
    %165 = tpu.concatenate %159, %154, %164, %7 in 0 : vector<16x128xf32>, vector<16x128xf32>, vector<16x128xf32>, vector<1x128xf32> -> vector<49x128xf32>
    %cst_74 = arith.constant dense<0.000000e+00> : vector<16x128xf32>
    %166 = tpu.matmul %0, %165, %cst_74 {dimension_numbers = #tpu.dot_dimension_numbers<[1], [0], [0], [1], [0, 0, 1, 1], [], []>} : vector<16x49xf32>, vector<49x128xf32>, vector<16x128xf32> -> vector<16x128xf32>
    %cst_75 = arith.constant 0.000000e+00 : f32
    %167 = vector.broadcast %cst_75 : f32 to vector<16x128xf32>
    %168 = arith.maximumf %166, %167 : vector<16x128xf32>
    %c1_i32_76 = arith.constant 1 : i32
    %169 = tpu.dynamic_rotate %168 by %c1_i32_76 dim 1 : vector<16x128xf32>, i32 -> vector<16x128xf32>
    %cst_77 = arith.constant 0.000000e+00 : f32
    %170 = vector.shape_cast %4 : vector<1x128xi1> to vector<1x128xi1>
    %171 = vector.broadcast %170 : vector<1x128xi1> to vector<16x128xi1>
    %172 = vector.broadcast %cst_77 : f32 to vector<16x128xf32>
    %173 = arith.select %171, %169, %172 : vector<16x128xi1>, vector<16x128xf32>
    %c127_i32_78 = arith.constant 127 : i32
    %174 = tpu.dynamic_rotate %168 by %c127_i32_78 dim 1 : vector<16x128xf32>, i32 -> vector<16x128xf32>
    %cst_79 = arith.constant 0.000000e+00 : f32
    %175 = vector.shape_cast %6 : vector<1x128xi1> to vector<1x128xi1>
    %176 = vector.broadcast %175 : vector<1x128xi1> to vector<16x128xi1>
    %177 = vector.broadcast %cst_79 : f32 to vector<16x128xf32>
    %178 = arith.select %176, %174, %177 : vector<16x128xi1>, vector<16x128xf32>
    %179 = tpu.concatenate %173, %168, %178, %7 in 0 : vector<16x128xf32>, vector<16x128xf32>, vector<16x128xf32>, vector<1x128xf32> -> vector<49x128xf32>
    %cst_80 = arith.constant dense<0.000000e+00> : vector<16x128xf32>
    %180 = tpu.matmul %1, %179, %cst_80 {dimension_numbers = #tpu.dot_dimension_numbers<[1], [0], [0], [1], [0, 0, 1, 1], [], []>} : vector<16x49xf32>, vector<49x128xf32>, vector<16x128xf32> -> vector<16x128xf32>
    %181 = arith.addf %180, %154 : vector<16x128xf32>
    %cst_81 = arith.constant 0.000000e+00 : f32
    %182 = vector.broadcast %cst_81 : f32 to vector<16x128xf32>
    %183 = arith.maximumf %181, %182 : vector<16x128xf32>
    %184 = arith.index_cast %c4_i32 : i32 to index
    %c0_82 = arith.constant 0 : index
    %c0_83 = arith.constant 0 : index
    %185 = vector.load %arg4[%184, %c0_82, %c0_83] : memref<8x16x128xf32, #tpu.memory_space<vmem>>, vector<1x16x128xf32>
    %186 = vector.shape_cast %185 : vector<1x16x128xf32> to vector<16x128xf32>
    %187 = vector.shape_cast %183 : vector<16x128xf32> to vector<1x16x128xf32>
    tpu.vector_store %arg4[%184, %c0_82, %c0_83], %187 {strides = array<i32>} : memref<8x16x128xf32, #tpu.memory_space<vmem>>, vector<1x16x128xf32>,
    %c5_i32 = arith.constant 5 : i32
    %188 = arith.index_cast %c5_i32 : i32 to index
    %c0_84 = arith.constant 0 : index
    %c0_85 = arith.constant 0 : index
    %189 = vector.load %arg1[%188, %c0_84, %c0_85] : memref<8x16x128xf32, #tpu.memory_space<vmem>>, vector<1x16x128xf32>
    %190 = vector.shape_cast %189 : vector<1x16x128xf32> to vector<16x128xf32>
    %c1_i32_86 = arith.constant 1 : i32
    %191 = tpu.dynamic_rotate %190 by %c1_i32_86 dim 1 : vector<16x128xf32>, i32 -> vector<16x128xf32>
    %cst_87 = arith.constant 0.000000e+00 : f32
    %192 = vector.shape_cast %4 : vector<1x128xi1> to vector<1x128xi1>
    %193 = vector.broadcast %192 : vector<1x128xi1> to vector<16x128xi1>
    %194 = vector.broadcast %cst_87 : f32 to vector<16x128xf32>
    %195 = arith.select %193, %191, %194 : vector<16x128xi1>, vector<16x128xf32>
    %c127_i32_88 = arith.constant 127 : i32
    %196 = tpu.dynamic_rotate %190 by %c127_i32_88 dim 1 : vector<16x128xf32>, i32 -> vector<16x128xf32>
    %cst_89 = arith.constant 0.000000e+00 : f32
    %197 = vector.shape_cast %6 : vector<1x128xi1> to vector<1x128xi1>
    %198 = vector.broadcast %197 : vector<1x128xi1> to vector<16x128xi1>
    %199 = vector.broadcast %cst_89 : f32 to vector<16x128xf32>
    %200 = arith.select %198, %196, %199 : vector<16x128xi1>, vector<16x128xf32>
    %201 = tpu.concatenate %195, %190, %200, %7 in 0 : vector<16x128xf32>, vector<16x128xf32>, vector<16x128xf32>, vector<1x128xf32> -> vector<49x128xf32>
    %cst_90 = arith.constant dense<0.000000e+00> : vector<16x128xf32>
    %202 = tpu.matmul %0, %201, %cst_90 {dimension_numbers = #tpu.dot_dimension_numbers<[1], [0], [0], [1], [0, 0, 1, 1], [], []>} : vector<16x49xf32>, vector<49x128xf32>, vector<16x128xf32> -> vector<16x128xf32>
    %cst_91 = arith.constant 0.000000e+00 : f32
    %203 = vector.broadcast %cst_91 : f32 to vector<16x128xf32>
    %204 = arith.maximumf %202, %203 : vector<16x128xf32>
    %c1_i32_92 = arith.constant 1 : i32
    %205 = tpu.dynamic_rotate %204 by %c1_i32_92 dim 1 : vector<16x128xf32>, i32 -> vector<16x128xf32>
    %cst_93 = arith.constant 0.000000e+00 : f32
    %206 = vector.shape_cast %4 : vector<1x128xi1> to vector<1x128xi1>
    %207 = vector.broadcast %206 : vector<1x128xi1> to vector<16x128xi1>
    %208 = vector.broadcast %cst_93 : f32 to vector<16x128xf32>
    %209 = arith.select %207, %205, %208 : vector<16x128xi1>, vector<16x128xf32>
    %c127_i32_94 = arith.constant 127 : i32
    %210 = tpu.dynamic_rotate %204 by %c127_i32_94 dim 1 : vector<16x128xf32>, i32 -> vector<16x128xf32>
    %cst_95 = arith.constant 0.000000e+00 : f32
    %211 = vector.shape_cast %6 : vector<1x128xi1> to vector<1x128xi1>
    %212 = vector.broadcast %211 : vector<1x128xi1> to vector<16x128xi1>
    %213 = vector.broadcast %cst_95 : f32 to vector<16x128xf32>
    %214 = arith.select %212, %210, %213 : vector<16x128xi1>, vector<16x128xf32>
    %215 = tpu.concatenate %209, %204, %214, %7 in 0 : vector<16x128xf32>, vector<16x128xf32>, vector<16x128xf32>, vector<1x128xf32> -> vector<49x128xf32>
    %cst_96 = arith.constant dense<0.000000e+00> : vector<16x128xf32>
    %216 = tpu.matmul %1, %215, %cst_96 {dimension_numbers = #tpu.dot_dimension_numbers<[1], [0], [0], [1], [0, 0, 1, 1], [], []>} : vector<16x49xf32>, vector<49x128xf32>, vector<16x128xf32> -> vector<16x128xf32>
    %217 = arith.addf %216, %190 : vector<16x128xf32>
    %cst_97 = arith.constant 0.000000e+00 : f32
    %218 = vector.broadcast %cst_97 : f32 to vector<16x128xf32>
    %219 = arith.maximumf %217, %218 : vector<16x128xf32>
    %220 = arith.index_cast %c5_i32 : i32 to index
    %c0_98 = arith.constant 0 : index
    %c0_99 = arith.constant 0 : index
    %221 = vector.load %arg4[%220, %c0_98, %c0_99] : memref<8x16x128xf32, #tpu.memory_space<vmem>>, vector<1x16x128xf32>
    %222 = vector.shape_cast %221 : vector<1x16x128xf32> to vector<16x128xf32>
    %223 = vector.shape_cast %219 : vector<16x128xf32> to vector<1x16x128xf32>
    tpu.vector_store %arg4[%220, %c0_98, %c0_99], %223 {strides = array<i32>} : memref<8x16x128xf32, #tpu.memory_space<vmem>>, vector<1x16x128xf32>,
    %c6_i32 = arith.constant 6 : i32
    %224 = arith.index_cast %c6_i32 : i32 to index
    %c0_100 = arith.constant 0 : index
    %c0_101 = arith.constant 0 : index
    %225 = vector.load %arg1[%224, %c0_100, %c0_101] : memref<8x16x128xf32, #tpu.memory_space<vmem>>, vector<1x16x128xf32>
    %226 = vector.shape_cast %225 : vector<1x16x128xf32> to vector<16x128xf32>
    %c1_i32_102 = arith.constant 1 : i32
    %227 = tpu.dynamic_rotate %226 by %c1_i32_102 dim 1 : vector<16x128xf32>, i32 -> vector<16x128xf32>
    %cst_103 = arith.constant 0.000000e+00 : f32
    %228 = vector.shape_cast %4 : vector<1x128xi1> to vector<1x128xi1>
    %229 = vector.broadcast %228 : vector<1x128xi1> to vector<16x128xi1>
    %230 = vector.broadcast %cst_103 : f32 to vector<16x128xf32>
    %231 = arith.select %229, %227, %230 : vector<16x128xi1>, vector<16x128xf32>
    %c127_i32_104 = arith.constant 127 : i32
    %232 = tpu.dynamic_rotate %226 by %c127_i32_104 dim 1 : vector<16x128xf32>, i32 -> vector<16x128xf32>
    %cst_105 = arith.constant 0.000000e+00 : f32
    %233 = vector.shape_cast %6 : vector<1x128xi1> to vector<1x128xi1>
    %234 = vector.broadcast %233 : vector<1x128xi1> to vector<16x128xi1>
    %235 = vector.broadcast %cst_105 : f32 to vector<16x128xf32>
    %236 = arith.select %234, %232, %235 : vector<16x128xi1>, vector<16x128xf32>
    %237 = tpu.concatenate %231, %226, %236, %7 in 0 : vector<16x128xf32>, vector<16x128xf32>, vector<16x128xf32>, vector<1x128xf32> -> vector<49x128xf32>
    %cst_106 = arith.constant dense<0.000000e+00> : vector<16x128xf32>
    %238 = tpu.matmul %0, %237, %cst_106 {dimension_numbers = #tpu.dot_dimension_numbers<[1], [0], [0], [1], [0, 0, 1, 1], [], []>} : vector<16x49xf32>, vector<49x128xf32>, vector<16x128xf32> -> vector<16x128xf32>
    %cst_107 = arith.constant 0.000000e+00 : f32
    %239 = vector.broadcast %cst_107 : f32 to vector<16x128xf32>
    %240 = arith.maximumf %238, %239 : vector<16x128xf32>
    %c1_i32_108 = arith.constant 1 : i32
    %241 = tpu.dynamic_rotate %240 by %c1_i32_108 dim 1 : vector<16x128xf32>, i32 -> vector<16x128xf32>
    %cst_109 = arith.constant 0.000000e+00 : f32
    %242 = vector.shape_cast %4 : vector<1x128xi1> to vector<1x128xi1>
    %243 = vector.broadcast %242 : vector<1x128xi1> to vector<16x128xi1>
    %244 = vector.broadcast %cst_109 : f32 to vector<16x128xf32>
    %245 = arith.select %243, %241, %244 : vector<16x128xi1>, vector<16x128xf32>
    %c127_i32_110 = arith.constant 127 : i32
    %246 = tpu.dynamic_rotate %240 by %c127_i32_110 dim 1 : vector<16x128xf32>, i32 -> vector<16x128xf32>
    %cst_111 = arith.constant 0.000000e+00 : f32
    %247 = vector.shape_cast %6 : vector<1x128xi1> to vector<1x128xi1>
    %248 = vector.broadcast %247 : vector<1x128xi1> to vector<16x128xi1>
    %249 = vector.broadcast %cst_111 : f32 to vector<16x128xf32>
    %250 = arith.select %248, %246, %249 : vector<16x128xi1>, vector<16x128xf32>
    %251 = tpu.concatenate %245, %240, %250, %7 in 0 : vector<16x128xf32>, vector<16x128xf32>, vector<16x128xf32>, vector<1x128xf32> -> vector<49x128xf32>
    %cst_112 = arith.constant dense<0.000000e+00> : vector<16x128xf32>
    %252 = tpu.matmul %1, %251, %cst_112 {dimension_numbers = #tpu.dot_dimension_numbers<[1], [0], [0], [1], [0, 0, 1, 1], [], []>} : vector<16x49xf32>, vector<49x128xf32>, vector<16x128xf32> -> vector<16x128xf32>
    %253 = arith.addf %252, %226 : vector<16x128xf32>
    %cst_113 = arith.constant 0.000000e+00 : f32
    %254 = vector.broadcast %cst_113 : f32 to vector<16x128xf32>
    %255 = arith.maximumf %253, %254 : vector<16x128xf32>
    %256 = arith.index_cast %c6_i32 : i32 to index
    %c0_114 = arith.constant 0 : index
    %c0_115 = arith.constant 0 : index
    %257 = vector.load %arg4[%256, %c0_114, %c0_115] : memref<8x16x128xf32, #tpu.memory_space<vmem>>, vector<1x16x128xf32>
    %258 = vector.shape_cast %257 : vector<1x16x128xf32> to vector<16x128xf32>
    %259 = vector.shape_cast %255 : vector<16x128xf32> to vector<1x16x128xf32>
    tpu.vector_store %arg4[%256, %c0_114, %c0_115], %259 {strides = array<i32>} : memref<8x16x128xf32, #tpu.memory_space<vmem>>, vector<1x16x128xf32>,
    %c7_i32 = arith.constant 7 : i32
    %260 = arith.index_cast %c7_i32 : i32 to index
    %c0_116 = arith.constant 0 : index
    %c0_117 = arith.constant 0 : index
    %261 = vector.load %arg1[%260, %c0_116, %c0_117] : memref<8x16x128xf32, #tpu.memory_space<vmem>>, vector<1x16x128xf32>
    %262 = vector.shape_cast %261 : vector<1x16x128xf32> to vector<16x128xf32>
    %c1_i32_118 = arith.constant 1 : i32
    %263 = tpu.dynamic_rotate %262 by %c1_i32_118 dim 1 : vector<16x128xf32>, i32 -> vector<16x128xf32>
    %cst_119 = arith.constant 0.000000e+00 : f32
    %264 = vector.shape_cast %4 : vector<1x128xi1> to vector<1x128xi1>
    %265 = vector.broadcast %264 : vector<1x128xi1> to vector<16x128xi1>
    %266 = vector.broadcast %cst_119 : f32 to vector<16x128xf32>
    %267 = arith.select %265, %263, %266 : vector<16x128xi1>, vector<16x128xf32>
    %c127_i32_120 = arith.constant 127 : i32
    %268 = tpu.dynamic_rotate %262 by %c127_i32_120 dim 1 : vector<16x128xf32>, i32 -> vector<16x128xf32>
    %cst_121 = arith.constant 0.000000e+00 : f32
    %269 = vector.shape_cast %6 : vector<1x128xi1> to vector<1x128xi1>
    %270 = vector.broadcast %269 : vector<1x128xi1> to vector<16x128xi1>
    %271 = vector.broadcast %cst_121 : f32 to vector<16x128xf32>
    %272 = arith.select %270, %268, %271 : vector<16x128xi1>, vector<16x128xf32>
    %273 = tpu.concatenate %267, %262, %272, %7 in 0 : vector<16x128xf32>, vector<16x128xf32>, vector<16x128xf32>, vector<1x128xf32> -> vector<49x128xf32>
    %cst_122 = arith.constant dense<0.000000e+00> : vector<16x128xf32>
    %274 = tpu.matmul %0, %273, %cst_122 {dimension_numbers = #tpu.dot_dimension_numbers<[1], [0], [0], [1], [0, 0, 1, 1], [], []>} : vector<16x49xf32>, vector<49x128xf32>, vector<16x128xf32> -> vector<16x128xf32>
    %cst_123 = arith.constant 0.000000e+00 : f32
    %275 = vector.broadcast %cst_123 : f32 to vector<16x128xf32>
    %276 = arith.maximumf %274, %275 : vector<16x128xf32>
    %c1_i32_124 = arith.constant 1 : i32
    %277 = tpu.dynamic_rotate %276 by %c1_i32_124 dim 1 : vector<16x128xf32>, i32 -> vector<16x128xf32>
    %cst_125 = arith.constant 0.000000e+00 : f32
    %278 = vector.shape_cast %4 : vector<1x128xi1> to vector<1x128xi1>
    %279 = vector.broadcast %278 : vector<1x128xi1> to vector<16x128xi1>
    %280 = vector.broadcast %cst_125 : f32 to vector<16x128xf32>
    %281 = arith.select %279, %277, %280 : vector<16x128xi1>, vector<16x128xf32>
    %c127_i32_126 = arith.constant 127 : i32
    %282 = tpu.dynamic_rotate %276 by %c127_i32_126 dim 1 : vector<16x128xf32>, i32 -> vector<16x128xf32>
    %cst_127 = arith.constant 0.000000e+00 : f32
    %283 = vector.shape_cast %6 : vector<1x128xi1> to vector<1x128xi1>
    %284 = vector.broadcast %283 : vector<1x128xi1> to vector<16x128xi1>
    %285 = vector.broadcast %cst_127 : f32 to vector<16x128xf32>
    %286 = arith.select %284, %282, %285 : vector<16x128xi1>, vector<16x128xf32>
    %287 = tpu.concatenate %281, %276, %286, %7 in 0 : vector<16x128xf32>, vector<16x128xf32>, vector<16x128xf32>, vector<1x128xf32> -> vector<49x128xf32>
    %cst_128 = arith.constant dense<0.000000e+00> : vector<16x128xf32>
    %288 = tpu.matmul %1, %287, %cst_128 {dimension_numbers = #tpu.dot_dimension_numbers<[1], [0], [0], [1], [0, 0, 1, 1], [], []>} : vector<16x49xf32>, vector<49x128xf32>, vector<16x128xf32> -> vector<16x128xf32>
    %289 = arith.addf %288, %262 : vector<16x128xf32>
    %cst_129 = arith.constant 0.000000e+00 : f32
    %290 = vector.broadcast %cst_129 : f32 to vector<16x128xf32>
    %291 = arith.maximumf %289, %290 : vector<16x128xf32>
    %292 = arith.index_cast %c7_i32 : i32 to index
    %c0_130 = arith.constant 0 : index
    %c0_131 = arith.constant 0 : index
    %293 = vector.load %arg4[%292, %c0_130, %c0_131] : memref<8x16x128xf32, #tpu.memory_space<vmem>>, vector<1x16x128xf32>
    %294 = vector.shape_cast %293 : vector<1x16x128xf32> to vector<16x128xf32>
    %295 = vector.shape_cast %291 : vector<16x128xf32> to vector<1x16x128xf32>
    tpu.vector_store %arg4[%292, %c0_130, %c0_131], %295 {strides = array<i32>} : memref<8x16x128xf32, #tpu.memory_space<vmem>>, vector<1x16x128xf32>,
    %c8_i32 = arith.constant 8 : i32
    return
  }
  func.func @transform_0(%arg0: i32) -> (i32, i32, i32) {
    %c0_i32 = arith.constant 0 : i32
    %c0_i32_0 = arith.constant 0 : i32
    %c0_i32_1 = arith.constant 0 : i32
    return %arg0, %c0_i32, %c0_i32_0 : i32, i32, i32
  }
  func.func @transform_1(%arg0: i32) -> (i32, i32) {
    %c0_i32 = arith.constant 0 : i32
    %c0_i32_0 = arith.constant 0 : i32
    %c0_i32_1 = arith.constant 0 : i32
    return %c0_i32, %c0_i32_0 : i32, i32
  }
  func.func @transform_2(%arg0: i32) -> (i32, i32) {
    %c0_i32 = arith.constant 0 : i32
    %c0_i32_0 = arith.constant 0 : i32
    %c0_i32_1 = arith.constant 0 : i32
    return %c0_i32, %c0_i32_0 : i32, i32
  }
  func.func @transform_3(%arg0: i32) -> (i32, i32, i32) {
    %c0_i32 = arith.constant 0 : i32
    %c0_i32_0 = arith.constant 0 : i32
    %c0_i32_1 = arith.constant 0 : i32
    return %arg0, %c0_i32, %c0_i32_0 : i32, i32, i32
  }
}

</mosaic_0001>

<llo_original>
// kernel: tpu_custom_call.1
$region0: #{tpu_custom_call.1}
  #allocation0 [shape = 'u32[]', space=smem, size = 0x4, offset = 0x4, fixed_abs, tag = 'smem constant byte address 0x4 - core index']
  #allocation1 [shape = 'u32[72,128]{1,0:T(1,128)}', space=vmem, size = 0x9000, scoped, tag = 'internal scratch']
  %s0 = inlined_call_operand.hbm [shape: f32[8,16,128], index: 0, kind: input, shape index: {}]
  %s1 = inlined_call_operand.hbm [shape: f32[16,49], index: 1, kind: input, shape index: {}]
  %s2 = inlined_call_operand.hbm [shape: f32[16,49], index: 2, kind: input, shape index: {}]
  %s3 = inlined_call_operand.hbm [shape: f32[8,16,128], index: 3, kind: output, shape index: {}]
  %s4 = sld [smem:[#allocation0]]
  $region34: #{tpu_custom_call.1} parent=0
    _
  %s6 = ssub.s32 1, %s4
  %s7 = scalar_select 0, %s6, %s4
  $region1: #{tpu_custom_call.1} parent=0
    #allocation2 [shape = 'u8[65536]{0}', space=vmem, size = 0x10000, scoped, tag = 'input window, operand 0, single buffered']
    #allocation3 [shape = 's32[1]{0}', space=sflag, size = 0x4, scoped, tag = 'scoped memory for tpu_custom_call.1']
    #allocation4 [shape = 's32[1]{0}', space=sflag, size = 0x4, scoped, tag = 'scoped memory for tpu_custom_call.1']
    #allocation5 [shape = 'u8[8192]{0}', space=vmem, size = 0x2000, scoped, tag = 'input window, operand 1, single buffered']
    #allocation6 [shape = 's32[1]{0}', space=sflag, size = 0x4, scoped, tag = 'scoped memory for tpu_custom_call.1']
    #allocation7 [shape = 'u8[8192]{0}', space=vmem, size = 0x2000, scoped, tag = 'input window, operand 2, single buffered']
    #allocation8 [shape = 'u8[65536]{0}', space=vmem, size = 0x10000, scoped, tag = 'output window, operand 0, single buffered']
    %8 = vsyncpa [#allocation3], 0
    %9 = vsyncpa [#allocation6], 0
    %10 = vsyncpa [#allocation4], 0
    // Predicated region
    $region2: #{tpu_custom_call.1} parent=1 // pred_check
      _
    $region3: #{tpu_custom_call.1} parent=1 // pred_check_branch
      %12 = sbr.rel (0) target = $region5
    $region4: #{tpu_custom_call.1} parent=1 // pred_region
      %14 = vsyncadd [#allocation3], 0
      %s15 = sshll.u32 %s0, 4
      %s16 = int_to_ptr.hbm [resolvable:$true] %s15
      %s17 = sshll.u32 [#allocation2], 4
      %s18 = int_to_ptr.vmem [resolvable:$true] %s17
      %23 = dma.hbm_to_vmem [thread:$0]  %s16, 2048, %s18, [#allocation3], 128, 128, 8
    $region5: #{tpu_custom_call.1} parent=1 // pred_fallthru
      _
    // Predicated region
    $region6: #{tpu_custom_call.1} parent=1 // pred_check
      _
    $region7: #{tpu_custom_call.1} parent=1 // pred_check_branch
      %25 = sbr.rel (0) target = $region9
    $region8: #{tpu_custom_call.1} parent=1 // pred_region
      %27 = vsyncadd [#allocation6], 0
      %s28 = sshll.u32 %s1, 4
      %s29 = int_to_ptr.hbm [resolvable:$true] %s28
      %s30 = sshll.u32 [#allocation5], 4
      %s31 = int_to_ptr.vmem [resolvable:$true] %s30
      %36 = dma.hbm_to_vmem [thread:$0]  %s29, 256, %s31, [#allocation6], 128, 128, 8
    $region9: #{tpu_custom_call.1} parent=1 // pred_fallthru
      _
    // Predicated region
    $region10: #{tpu_custom_call.1} parent=1 // pred_check
      _
    $region11: #{tpu_custom_call.1} parent=1 // pred_check_branch
      %38 = sbr.rel (0) target = $region13
    $region12: #{tpu_custom_call.1} parent=1 // pred_region
      %40 = vsyncadd [#allocation6], 0
      %s41 = sshll.u32 %s2, 4
      %s42 = int_to_ptr.hbm [resolvable:$true] %s41
      %s43 = sshll.u32 [#allocation7], 4
      %s44 = int_to_ptr.vmem [resolvable:$true] %s43
      %49 = dma.hbm_to_vmem [thread:$0]  %s42, 256, %s44, [#allocation6], 128, 128, 8
    $region13: #{tpu_custom_call.1} parent=1 // pred_fallthru
      _
    // Predicated region
    $region14: #{tpu_custom_call.1} parent=1 // pred_check
      _
    $region15: #{tpu_custom_call.1} parent=1 // pred_check_branch
      %51 = sbr.rel (0) target = $region17
    $region16: #{tpu_custom_call.1} parent=1 // pred_region
      %53 = dma.done [#allocation3], 2048
    $region17: #{tpu_custom_call.1} parent=1 // pred_fallthru
      _
    // Predicated region
    $region18: #{tpu_custom_call.1} parent=1 // pred_check
      _
    $region19: #{tpu_custom_call.1} parent=1 // pred_check_branch
      %55 = sbr.rel (0) target = $region21
    $region20: #{tpu_custom_call.1} parent=1 // pred_region
      %57 = dma.done [#allocation6], 256
    $region21: #{tpu_custom_call.1} parent=1 // pred_fallthru
      _
    // Predicated region
    $region22: #{tpu_custom_call.1} parent=1 // pred_check
      _
    $region23: #{tpu_custom_call.1} parent=1 // pred_check_branch
      %59 = sbr.rel (0) target = $region25
    $region24: #{tpu_custom_call.1} parent=1 // pred_region
      %61 = dma.done [#allocation6], 256
    $region25: #{tpu_custom_call.1} parent=1 // pred_fallthru
      _
    %v62 = vld [vmem:[#allocation5] sm:$0xff]
    %v63 = vld [vmem:[#allocation5 + $0x8] sm:$0xff]
    %v64 = vld [vmem:[#allocation7] sm:$0xff]
    %v65 = vld [vmem:[#allocation7 + $0x8] sm:$0xff]
    %v66 = vlaneseq
    %v67 = vand.u32 %v66, 127
    %vm68 = vcmp.ne.s32.totalorder %v67, 0
    %vm69 = vcmp.ne.s32.totalorder %v67, 127
    %v70 = vld [vmem:[#allocation2] sm:$0xff]
    %v71 = vld [vmem:[#allocation2 + $0x8] sm:$0xff]
    %72 = vrot.lane.b32.xlu0 %v70, 1
    %v73 = vpop.permute.xlu0 %72
    %74 = vrot.lane.b32.xlu0 %v71, 1
    %v75 = vpop.permute.xlu0 %74
    %v76 = vsel %vm68, 1, 0
    %vm77 = vcmp.eq.s32.totalorder %v76, 1
    %v78 = vsel %vm77, %v73, 0.0
    %v79 = vsel %vm77, %v75, 0.0
    %80 = vrot.lane.b32.xlu0 %v70, 127
    %v81 = vpop.permute.xlu0 %80
    %82 = vrot.lane.b32.xlu0 %v71, 127
    %v83 = vpop.permute.xlu0 %82
    %v84 = vsel %vm69, 1, 0
    %vm85 = vcmp.eq.s32.totalorder %v84, 1
    %v86 = vsel %vm85, %v81, 0.0
    %v87 = vsel %vm85, %v83, 0.0
    %vm88 = vcmask 400384
    %v90 = vsel %vm88, %v62, 0
    %v93 = vsel %vm88, %v63, 0
    %vm95 = vcmask 1040384
    %v97 = vsel %vm95, 1.0, 0
    %99 = vmatpush.msra.mxu0 0.0
    %100 = vmatpush.msra.mxu0 0.0
    %101 = vmatpush.msra.mxu0 0.0
    %102 = vmatpush.msra.mxu0 0.0
    %103 = vmatpush.msra.mxu0 0.0
    %104 = vmatpush.msra.mxu0 0.0
    %105 = vmatpush.msra.mxu0 0.0
    %106 = vmatpush.msra.mxu0 0.0
    %107 = vmatpush.msra.mxu0 0.0
    %108 = vmatpush.msra.mxu0 %v97
    %109 = vmatpush.msra.mxu0 %v87
    %110 = vmatpush.msra.mxu0 %v86
    %111 = vmatpush.msra.mxu0 %v71
    %112 = vmatpush.msra.mxu0 %v70
    %113 = vmatpush.msra.mxu0 %v79
    %114 = vmatpush.msra.mxu0 %v78
    %115 = vmatmul.f32.gmra.mxu0 %v90
    %v116 = vpop.f32.mrf.mxu0
    %v117 = vadd.f32 0.0, %v116
    %118 = vmatmul.f32.gmra.mxu0 %v93
    %v119 = vpop.f32.mrf.mxu0
    %v120 = vadd.f32 0.0, %v119
    %121 = vdwg.mxu0
    %v122 = vmax.f32 %v117, 0.0
    %v123 = vmax.f32 %v120, 0.0
    %124 = vrot.lane.b32.xlu0 %v122, 1
    %v125 = vpop.permute.xlu0 %124
    %126 = vrot.lane.b32.xlu0 %v123, 1
    %v127 = vpop.permute.xlu0 %126
    %v128 = vsel %vm77, %v125, 0.0
    %v129 = vsel %vm77, %v127, 0.0
    %130 = vrot.lane.b32.xlu0 %v122, 127
    %v131 = vpop.permute.xlu0 %130
    %132 = vrot.lane.b32.xlu0 %v123, 127
    %v133 = vpop.permute.xlu0 %132
    %v134 = vsel %vm85, %v131, 0.0
    %v135 = vsel %vm85, %v133, 0.0
    %v137 = vsel %vm88, %v64, 0
    %v140 = vsel %vm88, %v65, 0
    %142 = vmatpush.msra.mxu0 0.0
    %143 = vmatpush.msra.mxu0 0.0
    %144 = vmatpush.msra.mxu0 0.0
    %145 = vmatpush.msra.mxu0 0.0
    %146 = vmatpush.msra.mxu0 0.0
    %147 = vmatpush.msra.mxu0 0.0
    %148 = vmatpush.msra.mxu0 0.0
    %149 = vmatpush.msra.mxu0 0.0
    %150 = vmatpush.msra.mxu0 0.0
    %151 = vmatpush.msra.mxu0 %v97
    %152 = vmatpush.msra.mxu0 %v135
    %153 = vmatpush.msra.mxu0 %v134
    %154 = vmatpush.msra.mxu0 %v123
    %155 = vmatpush.msra.mxu0 %v122
    %156 = vmatpush.msra.mxu0 %v129
    %157 = vmatpush.msra.mxu0 %v128
    %158 = vmatmul.f32.gmra.mxu0 %v137
    %v159 = vpop.f32.mrf.mxu0
    %v160 = vadd.f32 %v70, %v159
    %161 = vmatmul.f32.gmra.mxu0 %v140
    %v162 = vpop.f32.mrf.mxu0
    %v163 = vadd.f32 %v71, %v162
    %164 = vdwg.mxu0
    %v165 = vmax.f32 %v160, 0.0
    %v166 = vmax.f32 %v163, 0.0
    %167 = vst [vmem:[#allocation8] sm:$0xff] %v165
    %168 = vst [vmem:[#allocation8 + $0x8] sm:$0xff] %v166
    %s169 = scalar_lea.vmem [#allocation2], 16
    %v170 = vld [vmem:[%s169] sm:$0xff]
    %v171 = vld [vmem:[%s169 + $0x8] sm:$0xff]
    %172 = vrot.lane.b32.xlu0 %v170, 1
    %v173 = vpop.permute.xlu0 %172
    %174 = vrot.lane.b32.xlu0 %v171, 1
    %v175 = vpop.permute.xlu0 %174
    %v176 = vsel %vm77, %v173, 0.0
    %v177 = vsel %vm77, %v175, 0.0
    %178 = vrot.lane.b32.xlu0 %v170, 127
    %v179 = vpop.permute.xlu0 %178
    %180 = vrot.lane.b32.xlu0 %v171, 127
    %v181 = vpop.permute.xlu0 %180
    %v182 = vsel %vm85, %v179, 0.0
    %v183 = vsel %vm85, %v181, 0.0
    %184 = vmatpush.msra.mxu0 0.0
    %185 = vmatpush.msra.mxu0 0.0
    %186 = vmatpush.msra.mxu0 0.0
    %187 = vmatpush.msra.mxu0 0.0
    %188 = vmatpush.msra.mxu0 0.0
    %189 = vmatpush.msra.mxu0 0.0
    %190 = vmatpush.msra.mxu0 0.0
    %191 = vmatpush.msra.mxu0 0.0
    %192 = vmatpush.msra.mxu0 0.0
    %193 = vmatpush.msra.mxu0 %v97
    %194 = vmatpush.msra.mxu0 %v183
    %195 = vmatpush.msra.mxu0 %v182
    %196 = vmatpush.msra.mxu0 %v171
    %197 = vmatpush.msra.mxu0 %v170
    %198 = vmatpush.msra.mxu0 %v177
    %199 = vmatpush.msra.mxu0 %v176
    %200 = vmatmul.f32.gmra.mxu0 %v90
    %v201 = vpop.f32.mrf.mxu0
    %v202 = vadd.f32 0.0, %v201
    %203 = vmatmul.f32.gmra.mxu0 %v93
    %v204 = vpop.f32.mrf.mxu0
    %v205 = vadd.f32 0.0, %v204
    %206 = vdwg.mxu0
    %v207 = vmax.f32 %v202, 0.0
    %v208 = vmax.f32 %v205, 0.0
    %209 = vrot.lane.b32.xlu0 %v207, 1
    %v210 = vpop.permute.xlu0 %209
    %211 = vrot.lane.b32.xlu0 %v208, 1
    %v212 = vpop.permute.xlu0 %211
    %v213 = vsel %vm77, %v210, 0.0
    %v214 = vsel %vm77, %v212, 0.0
    %215 = vrot.lane.b32.xlu0 %v207, 127
    %v216 = vpop.permute.xlu0 %215
    %217 = vrot.lane.b32.xlu0 %v208, 127
    %v218 = vpop.permute.xlu0 %217
    %v219 = vsel %vm85, %v216, 0.0
    %v220 = vsel %vm85, %v218, 0.0
    %221 = vmatpush.msra.mxu0 0.0
    %222 = vmatpush.msra.mxu0 0.0
    %223 = vmatpush.msra.mxu0 0.0
    %224 = vmatpush.msra.mxu0 0.0
    %225 = vmatpush.msra.mxu0 0.0
    %226 = vmatpush.msra.mxu0 0.0
    %227 = vmatpush.msra.mxu0 0.0
    %228 = vmatpush.msra.mxu0 0.0
    %229 = vmatpush.msra.mxu0 0.0
    %230 = vmatpush.msra.mxu0 %v97
    %231 = vmatpush.msra.mxu0 %v220
    %232 = vmatpush.msra.mxu0 %v219
    %233 = vmatpush.msra.mxu0 %v208
    %234 = vmatpush.msra.mxu0 %v207
    %235 = vmatpush.msra.mxu0 %v214
    %236 = vmatpush.msra.mxu0 %v213
    %237 = vmatmul.f32.gmra.mxu0 %v137
    %v238 = vpop.f32.mrf.mxu0
    %v239 = vadd.f32 %v170, %v238
    %240 = vmatmul.f32.gmra.mxu0 %v140
    %v241 = vpop.f32.mrf.mxu0
    %v242 = vadd.f32 %v171, %v241
    %243 = vdwg.mxu0
    %v244 = vmax.f32 %v239, 0.0
    %v245 = vmax.f32 %v242, 0.0
    %s246 = scalar_lea.vmem [#allocation8], 16
    %247 = vst [vmem:[%s246] sm:$0xff] %v244
    %248 = vst [vmem:[%s246 + $0x8] sm:$0xff] %v245
    %s249 = scalar_lea.vmem [#allocation2], 32
    %v250 = vld [vmem:[%s249] sm:$0xff]
    %v251 = vld [vmem:[%s249 + $0x8] sm:$0xff]
    %252 = vrot.lane.b32.xlu0 %v250, 1
    %v253 = vpop.permute.xlu0 %252
    %254 = vrot.lane.b32.xlu0 %v251, 1
    %v255 = vpop.permute.xlu0 %254
    %v256 = vsel %vm77, %v253, 0.0
    %v257 = vsel %vm77, %v255, 0.0
    %258 = vrot.lane.b32.xlu0 %v250, 127
    %v259 = vpop.permute.xlu0 %258
    %260 = vrot.lane.b32.xlu0 %v251, 127
    %v261 = vpop.permute.xlu0 %260
    %v262 = vsel %vm85, %v259, 0.0
    %v263 = vsel %vm85, %v261, 0.0
    %264 = vmatpush.msra.mxu0 0.0
    %265 = vmatpush.msra.mxu0 0.0
    %266 = vmatpush.msra.mxu0 0.0
    %267 = vmatpush.msra.mxu0 0.0
    %268 = vmatpush.msra.mxu0 0.0
    %269 = vmatpush.msra.mxu0 0.0
    %270 = vmatpush.msra.mxu0 0.0
    %271 = vmatpush.msra.mxu0 0.0
    %272 = vmatpush.msra.mxu0 0.0
    %273 = vmatpush.msra.mxu0 %v97
    %274 = vmatpush.msra.mxu0 %v263
    %275 = vmatpush.msra.mxu0 %v262
    %276 = vmatpush.msra.mxu0 %v251
    %277 = vmatpush.msra.mxu0 %v250
    %278 = vmatpush.msra.mxu0 %v257
    %279 = vmatpush.msra.mxu0 %v256
    %280 = vmatmul.f32.gmra.mxu0 %v90
    %v281 = vpop.f32.mrf.mxu0
    %v282 = vadd.f32 0.0, %v281
    %283 = vmatmul.f32.gmra.mxu0 %v93
    %v284 = vpop.f32.mrf.mxu0
    %v285 = vadd.f32 0.0, %v284
    %286 = vdwg.mxu0
    %v287 = vmax.f32 %v282, 0.0
    %v288 = vmax.f32 %v285, 0.0
    %289 = vrot.lane.b32.xlu0 %v287, 1
    %v290 = vpop.permute.xlu0 %289
    %291 = vrot.lane.b32.xlu0 %v288, 1
    %v292 = vpop.permute.xlu0 %291
    %v293 = vsel %vm77, %v290, 0.0
    %v294 = vsel %vm77, %v292, 0.0
    %295 = vrot.lane.b32.xlu0 %v287, 127
    %v296 = vpop.permute.xlu0 %295
    %297 = vrot.lane.b32.xlu0 %v288, 127
    %v298 = vpop.permute.xlu0 %297
    %v299 = vsel %vm85, %v296, 0.0
    %v300 = vsel %vm85, %v298, 0.0
    %301 = vmatpush.msra.mxu0 0.0
    %302 = vmatpush.msra.mxu0 0.0
    %303 = vmatpush.msra.mxu0 0.0
    %304 = vmatpush.msra.mxu0 0.0
    %305 = vmatpush.msra.mxu0 0.0
    %306 = vmatpush.msra.mxu0 0.0
    %307 = vmatpush.msra.mxu0 0.0
    %308 = vmatpush.msra.mxu0 0.0
    %309 = vmatpush.msra.mxu0 0.0
    %310 = vmatpush.msra.mxu0 %v97
    %311 = vmatpush.msra.mxu0 %v300
    %312 = vmatpush.msra.mxu0 %v299
    %313 = vmatpush.msra.mxu0 %v288
    %314 = vmatpush.msra.mxu0 %v287
    %315 = vmatpush.msra.mxu0 %v294
    %316 = vmatpush.msra.mxu0 %v293
    %317 = vmatmul.f32.gmra.mxu0 %v137
    %v318 = vpop.f32.mrf.mxu0
    %v319 = vadd.f32 %v250, %v318
    %320 = vmatmul.f32.gmra.mxu0 %v140
    %v321 = vpop.f32.mrf.mxu0
    %v322 = vadd.f32 %v251, %v321
    %323 = vdwg.mxu0
    %v324 = vmax.f32 %v319, 0.0
    %v325 = vmax.f32 %v322, 0.0
    %s326 = scalar_lea.vmem [#allocation8], 32
    %327 = vst [vmem:[%s326] sm:$0xff] %v324
    %328 = vst [vmem:[%s326 + $0x8] sm:$0xff] %v325
    %s329 = scalar_lea.vmem [#allocation2], 48
    %v330 = vld [vmem:[%s329] sm:$0xff]
    %v331 = vld [vmem:[%s329 + $0x8] sm:$0xff]
    %332 = vrot.lane.b32.xlu0 %v330, 1
    %v333 = vpop.permute.xlu0 %332
    %334 = vrot.lane.b32.xlu0 %v331, 1
    %v335 = vpop.permute.xlu0 %334
    %v336 = vsel %vm77, %v333, 0.0
    %v337 = vsel %vm77, %v335, 0.0
    %338 = vrot.lane.b32.xlu0 %v330, 127
    %v339 = vpop.permute.xlu0 %338
    %340 = vrot.lane.b32.xlu0 %v331, 127
    %v341 = vpop.permute.xlu0 %340
    %v342 = vsel %vm85, %v339, 0.0
    %v343 = vsel %vm85, %v341, 0.0
    %344 = vmatpush.msra.mxu0 0.0
    %345 = vmatpush.msra.mxu0 0.0
    %346 = vmatpush.msra.mxu0 0.0
    %347 = vmatpush.msra.mxu0 0.0
    %348 = vmatpush.msra.mxu0 0.0
    %349 = vmatpush.msra.mxu0 0.0
    %350 = vmatpush.msra.mxu0 0.0
    %351 = vmatpush.msra.mxu0 0.0
    %352 = vmatpush.msra.mxu0 0.0
    %353 = vmatpush.msra.mxu0 %v97
    %354 = vmatpush.msra.mxu0 %v343
    %355 = vmatpush.msra.mxu0 %v342
    %356 = vmatpush.msra.mxu0 %v331
    %357 = vmatpush.msra.mxu0 %v330
    %358 = vmatpush.msra.mxu0 %v337
    %359 = vmatpush.msra.mxu0 %v336
    %360 = vmatmul.f32.gmra.mxu0 %v90
    %v361 = vpop.f32.mrf.mxu0
    %v362 = vadd.f32 0.0, %v361
    %363 = vmatmul.f32.gmra.mxu0 %v93
    %v364 = vpop.f32.mrf.mxu0
    %v365 = vadd.f32 0.0, %v364
    %366 = vdwg.mxu0
    %v367 = vmax.f32 %v362, 0.0
    %v368 = vmax.f32 %v365, 0.0
    %369 = vrot.lane.b32.xlu0 %v367, 1
    %v370 = vpop.permute.xlu0 %369
    %371 = vrot.lane.b32.xlu0 %v368, 1
    %v372 = vpop.permute.xlu0 %371
    %v373 = vsel %vm77, %v370, 0.0
    %v374 = vsel %vm77, %v372, 0.0
    %375 = vrot.lane.b32.xlu0 %v367, 127
    %v376 = vpop.permute.xlu0 %375
    %377 = vrot.lane.b32.xlu0 %v368, 127
    %v378 = vpop.permute.xlu0 %377
    %v379 = vsel %vm85, %v376, 0.0
    %v380 = vsel %vm85, %v378, 0.0
    %381 = vmatpush.msra.mxu0 0.0
    %382 = vmatpush.msra.mxu0 0.0
    %383 = vmatpush.msra.mxu0 0.0
    %384 = vmatpush.msra.mxu0 0.0
    %385 = vmatpush.msra.mxu0 0.0
    %386 = vmatpush.msra.mxu0 0.0
    %387 = vmatpush.msra.mxu0 0.0
    %388 = vmatpush.msra.mxu0 0.0
    %389 = vmatpush.msra.mxu0 0.0
    %390 = vmatpush.msra.mxu0 %v97
    %391 = vmatpush.msra.mxu0 %v380
    %392 = vmatpush.msra.mxu0 %v379
    %393 = vmatpush.msra.mxu0 %v368
    %394 = vmatpush.msra.mxu0 %v367
    %395 = vmatpush.msra.mxu0 %v374
    %396 = vmatpush.msra.mxu0 %v373
    %397 = vmatmul.f32.gmra.mxu0 %v137
    %v398 = vpop.f32.mrf.mxu0
    %v399 = vadd.f32 %v330, %v398
    %400 = vmatmul.f32.gmra.mxu0 %v140
    %v401 = vpop.f32.mrf.mxu0
    %v402 = vadd.f32 %v331, %v401
    %403 = vdwg.mxu0
    %v404 = vmax.f32 %v399, 0.0
    %v405 = vmax.f32 %v402, 0.0
    %s406 = scalar_lea.vmem [#allocation8], 48
    %407 = vst [vmem:[%s406] sm:$0xff] %v404
    %408 = vst [vmem:[%s406 + $0x8] sm:$0xff] %v405
    %s409 = scalar_lea.vmem [#allocation2], 64
    %v410 = vld [vmem:[%s409] sm:$0xff]
    %v411 = vld [vmem:[%s409 + $0x8] sm:$0xff]
    %412 = vrot.lane.b32.xlu0 %v410, 1
    %v413 = vpop.permute.xlu0 %412
    %414 = vrot.lane.b32.xlu0 %v411, 1
    %v415 = vpop.permute.xlu0 %414
    %v416 = vsel %vm77, %v413, 0.0
    %v417 = vsel %vm77, %v415, 0.0
    %418 = vrot.lane.b32.xlu0 %v410, 127
    %v419 = vpop.permute.xlu0 %418
    %420 = vrot.lane.b32.xlu0 %v411, 127
    %v421 = vpop.permute.xlu0 %420
    %v422 = vsel %vm85, %v419, 0.0
    %v423 = vsel %vm85, %v421, 0.0
    %424 = vmatpush.msra.mxu0 0.0
    %425 = vmatpush.msra.mxu0 0.0
    %426 = vmatpush.msra.mxu0 0.0
    %427 = vmatpush.msra.mxu0 0.0
    %428 = vmatpush.msra.mxu0 0.0
    %429 = vmatpush.msra.mxu0 0.0
    %430 = vmatpush.msra.mxu0 0.0
    %431 = vmatpush.msra.mxu0 0.0
    %432 = vmatpush.msra.mxu0 0.0
    %433 = vmatpush.msra.mxu0 %v97
    %434 = vmatpush.msra.mxu0 %v423
    %435 = vmatpush.msra.mxu0 %v422
    %436 = vmatpush.msra.mxu0 %v411
    %437 = vmatpush.msra.mxu0 %v410
    %438 = vmatpush.msra.mxu0 %v417
    %439 = vmatpush.msra.mxu0 %v416
    %440 = vmatmul.f32.gmra.mxu0 %v90
    %v441 = vpop.f32.mrf.mxu0
    %v442 = vadd.f32 0.0, %v441
    %443 = vmatmul.f32.gmra.mxu0 %v93
    %v444 = vpop.f32.mrf.mxu0
    %v445 = vadd.f32 0.0, %v444
    %446 = vdwg.mxu0
    %v447 = vmax.f32 %v442, 0.0
    %v448 = vmax.f32 %v445, 0.0
    %449 = vrot.lane.b32.xlu0 %v447, 1
    %v450 = vpop.permute.xlu0 %449
    %451 = vrot.lane.b32.xlu0 %v448, 1
    %v452 = vpop.permute.xlu0 %451
    %v453 = vsel %vm77, %v450, 0.0
    %v454 = vsel %vm77, %v452, 0.0
    %455 = vrot.lane.b32.xlu0 %v447, 127
    %v456 = vpop.permute.xlu0 %455
    %457 = vrot.lane.b32.xlu0 %v448, 127
    %v458 = vpop.permute.xlu0 %457
    %v459 = vsel %vm85, %v456, 0.0
    %v460 = vsel %vm85, %v458, 0.0
    %461 = vmatpush.msra.mxu0 0.0
    %462 = vmatpush.msra.mxu0 0.0
    %463 = vmatpush.msra.mxu0 0.0
    %464 = vmatpush.msra.mxu0 0.0
    %465 = vmatpush.msra.mxu0 0.0
    %466 = vmatpush.msra.mxu0 0.0
    %467 = vmatpush.msra.mxu0 0.0
    %468 = vmatpush.msra.mxu0 0.0
    %469 = vmatpush.msra.mxu0 0.0
    %470 = vmatpush.msra.mxu0 %v97
    %471 = vmatpush.msra.mxu0 %v460
    %472 = vmatpush.msra.mxu0 %v459
    %473 = vmatpush.msra.mxu0 %v448
    %474 = vmatpush.msra.mxu0 %v447
    %475 = vmatpush.msra.mxu0 %v454
    %476 = vmatpush.msra.mxu0 %v453
    %477 = vmatmul.f32.gmra.mxu0 %v137
    %v478 = vpop.f32.mrf.mxu0
    %v479 = vadd.f32 %v410, %v478
    %480 = vmatmul.f32.gmra.mxu0 %v140
    %v481 = vpop.f32.mrf.mxu0
    %v482 = vadd.f32 %v411, %v481
    %483 = vdwg.mxu0
    %v484 = vmax.f32 %v479, 0.0
    %v485 = vmax.f32 %v482, 0.0
    %s486 = scalar_lea.vmem [#allocation8], 64
    %487 = vst [vmem:[%s486] sm:$0xff] %v484
    %488 = vst [vmem:[%s486 + $0x8] sm:$0xff] %v485
    %s489 = scalar_lea.vmem [#allocation2], 80
    %v490 = vld [vmem:[%s489] sm:$0xff]
    %v491 = vld [vmem:[%s489 + $0x8] sm:$0xff]
    %492 = vrot.lane.b32.xlu0 %v490, 1
    %v493 = vpop.permute.xlu0 %492
    %494 = vrot.lane.b32.xlu0 %v491, 1
    %v495 = vpop.permute.xlu0 %494
    %v496 = vsel %vm77, %v493, 0.0
    %v497 = vsel %vm77, %v495, 0.0
    %498 = vrot.lane.b32.xlu0 %v490, 127
    %v499 = vpop.permute.xlu0 %498
    %500 = vrot.lane.b32.xlu0 %v491, 127
    %v501 = vpop.permute.xlu0 %500
    %v502 = vsel %vm85, %v499, 0.0
    %v503 = vsel %vm85, %v501, 0.0
    %504 = vmatpush.msra.mxu0 0.0
    %505 = vmatpush.msra.mxu0 0.0
    %506 = vmatpush.msra.mxu0 0.0
    %507 = vmatpush.msra.mxu0 0.0
    %508 = vmatpush.msra.mxu0 0.0
    %509 = vmatpush.msra.mxu0 0.0
    %510 = vmatpush.msra.mxu0 0.0
    %511 = vmatpush.msra.mxu0 0.0
    %512 = vmatpush.msra.mxu0 0.0
    %513 = vmatpush.msra.mxu0 %v97
    %514 = vmatpush.msra.mxu0 %v503
    %515 = vmatpush.msra.mxu0 %v502
    %516 = vmatpush.msra.mxu0 %v491
    %517 = vmatpush.msra.mxu0 %v490
    %518 = vmatpush.msra.mxu0 %v497
    %519 = vmatpush.msra.mxu0 %v496
    %520 = vmatmul.f32.gmra.mxu0 %v90
    %v521 = vpop.f32.mrf.mxu0
    %v522 = vadd.f32 0.0, %v521
    %523 = vmatmul.f32.gmra.mxu0 %v93
    %v524 = vpop.f32.mrf.mxu0
    %v525 = vadd.f32 0.0, %v524
    %526 = vdwg.mxu0
    %v527 = vmax.f32 %v522, 0.0
    %v528 = vmax.f32 %v525, 0.0
    %529 = vrot.lane.b32.xlu0 %v527, 1
    %v530 = vpop.permute.xlu0 %529
    %531 = vrot.lane.b32.xlu0 %v528, 1
    %v532 = vpop.permute.xlu0 %531
    %v533 = vsel %vm77, %v530, 0.0
    %v534 = vsel %vm77, %v532, 0.0
    %535 = vrot.lane.b32.xlu0 %v527, 127
    %v536 = vpop.permute.xlu0 %535
    %537 = vrot.lane.b32.xlu0 %v528, 127
    %v538 = vpop.permute.xlu0 %537
    %v539 = vsel %vm85, %v536, 0.0
    %v540 = vsel %vm85, %v538, 0.0
    %541 = vmatpush.msra.mxu0 0.0
    %542 = vmatpush.msra.mxu0 0.0
    %543 = vmatpush.msra.mxu0 0.0
    %544 = vmatpush.msra.mxu0 0.0
    %545 = vmatpush.msra.mxu0 0.0
    %546 = vmatpush.msra.mxu0 0.0
    %547 = vmatpush.msra.mxu0 0.0
    %548 = vmatpush.msra.mxu0 0.0
    %549 = vmatpush.msra.mxu0 0.0
    %550 = vmatpush.msra.mxu0 %v97
    %551 = vmatpush.msra.mxu0 %v540
    %552 = vmatpush.msra.mxu0 %v539
    %553 = vmatpush.msra.mxu0 %v528
    %554 = vmatpush.msra.mxu0 %v527
    %555 = vmatpush.msra.mxu0 %v534
    %556 = vmatpush.msra.mxu0 %v533
    %557 = vmatmul.f32.gmra.mxu0 %v137
    %v558 = vpop.f32.mrf.mxu0
    %v559 = vadd.f32 %v490, %v558
    %560 = vmatmul.f32.gmra.mxu0 %v140
    %v561 = vpop.f32.mrf.mxu0
    %v562 = vadd.f32 %v491, %v561
    %563 = vdwg.mxu0
    %v564 = vmax.f32 %v559, 0.0
    %v565 = vmax.f32 %v562, 0.0
    %s566 = scalar_lea.vmem [#allocation8], 80
    %567 = vst [vmem:[%s566] sm:$0xff] %v564
    %568 = vst [vmem:[%s566 + $0x8] sm:$0xff] %v565
    %s569 = scalar_lea.vmem [#allocation2], 96
    %v570 = vld [vmem:[%s569] sm:$0xff]
    %v571 = vld [vmem:[%s569 + $0x8] sm:$0xff]
    %572 = vrot.lane.b32.xlu0 %v570, 1
    %v573 = vpop.permute.xlu0 %572
    %574 = vrot.lane.b32.xlu0 %v571, 1
    %v575 = vpop.permute.xlu0 %574
    %v576 = vsel %vm77, %v573, 0.0
    %v577 = vsel %vm77, %v575, 0.0
    %578 = vrot.lane.b32.xlu0 %v570, 127
    %v579 = vpop.permute.xlu0 %578
    %580 = vrot.lane.b32.xlu0 %v571, 127
    %v581 = vpop.permute.xlu0 %580
    %v582 = vsel %vm85, %v579, 0.0
    %v583 = vsel %vm85, %v581, 0.0
    %584 = vmatpush.msra.mxu0 0.0
    %585 = vmatpush.msra.mxu0 0.0
    %586 = vmatpush.msra.mxu0 0.0
    %587 = vmatpush.msra.mxu0 0.0
    %588 = vmatpush.msra.mxu0 0.0
    %589 = vmatpush.msra.mxu0 0.0
    %590 = vmatpush.msra.mxu0 0.0
    %591 = vmatpush.msra.mxu0 0.0
    %592 = vmatpush.msra.mxu0 0.0
    %593 = vmatpush.msra.mxu0 %v97
    %594 = vmatpush.msra.mxu0 %v583
    %595 = vmatpush.msra.mxu0 %v582
    %596 = vmatpush.msra.mxu0 %v571
    %597 = vmatpush.msra.mxu0 %v570
    %598 = vmatpush.msra.mxu0 %v577
    %599 = vmatpush.msra.mxu0 %v576
    %600 = vmatmul.f32.gmra.mxu0 %v90
    %v601 = vpop.f32.mrf.mxu0
    %v602 = vadd.f32 0.0, %v601
    %603 = vmatmul.f32.gmra.mxu0 %v93
    %v604 = vpop.f32.mrf.mxu0
    %v605 = vadd.f32 0.0, %v604
    %606 = vdwg.mxu0
    %v607 = vmax.f32 %v602, 0.0
    %v608 = vmax.f32 %v605, 0.0
    %609 = vrot.lane.b32.xlu0 %v607, 1
    %v610 = vpop.permute.xlu0 %609
    %611 = vrot.lane.b32.xlu0 %v608, 1
    %v612 = vpop.permute.xlu0 %611
    %v613 = vsel %vm77, %v610, 0.0
    %v614 = vsel %vm77, %v612, 0.0
    %615 = vrot.lane.b32.xlu0 %v607, 127
    %v616 = vpop.permute.xlu0 %615
    %617 = vrot.lane.b32.xlu0 %v608, 127
    %v618 = vpop.permute.xlu0 %617
    %v619 = vsel %vm85, %v616, 0.0
    %v620 = vsel %vm85, %v618, 0.0
    %621 = vmatpush.msra.mxu0 0.0
    %622 = vmatpush.msra.mxu0 0.0
    %623 = vmatpush.msra.mxu0 0.0
    %624 = vmatpush.msra.mxu0 0.0
    %625 = vmatpush.msra.mxu0 0.0
    %626 = vmatpush.msra.mxu0 0.0
    %627 = vmatpush.msra.mxu0 0.0
    %628 = vmatpush.msra.mxu0 0.0
    %629 = vmatpush.msra.mxu0 0.0
    %630 = vmatpush.msra.mxu0 %v97
    %631 = vmatpush.msra.mxu0 %v620
    %632 = vmatpush.msra.mxu0 %v619
    %633 = vmatpush.msra.mxu0 %v608
    %634 = vmatpush.msra.mxu0 %v607
    %635 = vmatpush.msra.mxu0 %v614
    %636 = vmatpush.msra.mxu0 %v613
    %637 = vmatmul.f32.gmra.mxu0 %v137
    %v638 = vpop.f32.mrf.mxu0
    %v639 = vadd.f32 %v570, %v638
    %640 = vmatmul.f32.gmra.mxu0 %v140
    %v641 = vpop.f32.mrf.mxu0
    %v642 = vadd.f32 %v571, %v641
    %643 = vdwg.mxu0
    %v644 = vmax.f32 %v639, 0.0
    %v645 = vmax.f32 %v642, 0.0
    %s646 = scalar_lea.vmem [#allocation8], 96
    %647 = vst [vmem:[%s646] sm:$0xff] %v644
    %648 = vst [vmem:[%s646 + $0x8] sm:$0xff] %v645
    %s649 = scalar_lea.vmem [#allocation2], 112
    %v650 = vld [vmem:[%s649] sm:$0xff]
    %v651 = vld [vmem:[%s649 + $0x8] sm:$0xff]
    %652 = vrot.lane.b32.xlu0 %v650, 1
    %v653 = vpop.permute.xlu0 %652
    %654 = vrot.lane.b32.xlu0 %v651, 1
    %v655 = vpop.permute.xlu0 %654
    %v656 = vsel %vm77, %v653, 0.0
    %v657 = vsel %vm77, %v655, 0.0
    %658 = vrot.lane.b32.xlu0 %v650, 127
    %v659 = vpop.permute.xlu0 %658
    %660 = vrot.lane.b32.xlu0 %v651, 127
    %v661 = vpop.permute.xlu0 %660
    %v662 = vsel %vm85, %v659, 0.0
    %v663 = vsel %vm85, %v661, 0.0
    %664 = vmatpush.msra.mxu0 0.0
    %665 = vmatpush.msra.mxu0 0.0
    %666 = vmatpush.msra.mxu0 0.0
    %667 = vmatpush.msra.mxu0 0.0
    %668 = vmatpush.msra.mxu0 0.0
    %669 = vmatpush.msra.mxu0 0.0
    %670 = vmatpush.msra.mxu0 0.0
    %671 = vmatpush.msra.mxu0 0.0
    %672 = vmatpush.msra.mxu0 0.0
    %673 = vmatpush.msra.mxu0 %v97
    %674 = vmatpush.msra.mxu0 %v663
    %675 = vmatpush.msra.mxu0 %v662
    %676 = vmatpush.msra.mxu0 %v651
    %677 = vmatpush.msra.mxu0 %v650
    %678 = vmatpush.msra.mxu0 %v657
    %679 = vmatpush.msra.mxu0 %v656
    %680 = vmatmul.f32.gmra.mxu0 %v90
    %v681 = vpop.f32.mrf.mxu0
    %v682 = vadd.f32 0.0, %v681
    %683 = vmatmul.f32.gmra.mxu0 %v93
    %v684 = vpop.f32.mrf.mxu0
    %v685 = vadd.f32 0.0, %v684
    %686 = vdwg.mxu0
    %v687 = vmax.f32 %v682, 0.0
    %v688 = vmax.f32 %v685, 0.0
    %689 = vrot.lane.b32.xlu0 %v687, 1
    %v690 = vpop.permute.xlu0 %689
    %691 = vrot.lane.b32.xlu0 %v688, 1
    %v692 = vpop.permute.xlu0 %691
    %v693 = vsel %vm77, %v690, 0.0
    %v694 = vsel %vm77, %v692, 0.0
    %695 = vrot.lane.b32.xlu0 %v687, 127
    %v696 = vpop.permute.xlu0 %695
    %697 = vrot.lane.b32.xlu0 %v688, 127
    %v698 = vpop.permute.xlu0 %697
    %v699 = vsel %vm85, %v696, 0.0
    %v700 = vsel %vm85, %v698, 0.0
    %701 = vmatpush.msra.mxu0 0.0
    %702 = vmatpush.msra.mxu0 0.0
    %703 = vmatpush.msra.mxu0 0.0
    %704 = vmatpush.msra.mxu0 0.0
    %705 = vmatpush.msra.mxu0 0.0
    %706 = vmatpush.msra.mxu0 0.0
    %707 = vmatpush.msra.mxu0 0.0
    %708 = vmatpush.msra.mxu0 0.0
    %709 = vmatpush.msra.mxu0 0.0
    %710 = vmatpush.msra.mxu0 %v97
    %711 = vmatpush.msra.mxu0 %v700
    %712 = vmatpush.msra.mxu0 %v699
    %713 = vmatpush.msra.mxu0 %v688
    %714 = vmatpush.msra.mxu0 %v687
    %715 = vmatpush.msra.mxu0 %v694
    %716 = vmatpush.msra.mxu0 %v693
    %717 = vmatmul.f32.gmra.mxu0 %v137
    %v718 = vpop.f32.mrf.mxu0
    %v719 = vadd.f32 %v650, %v718
    %720 = vmatmul.f32.gmra.mxu0 %v140
    %v721 = vpop.f32.mrf.mxu0
    %v722 = vadd.f32 %v651, %v721
    %723 = vdwg.mxu0
    %v724 = vmax.f32 %v719, 0.0
    %v725 = vmax.f32 %v722, 0.0
    %s726 = scalar_lea.vmem [#allocation8], 112
    %727 = vst [vmem:[%s726] sm:$0xff] %v724
    %728 = vst [vmem:[%s726 + $0x8] sm:$0xff] %v725
    // Predicated region
    $region26: #{tpu_custom_call.1} parent=1 // pred_check
      _
    $region27: #{tpu_custom_call.1} parent=1 // pred_check_branch
      %730 = sbr.rel (0) target = $region29
    $region28: #{tpu_custom_call.1} parent=1 // pred_region
      %732 = vsyncadd [#allocation4], 0
      %s733 = sshll.u32 [#allocation8], 4
      %s734 = int_to_ptr.vmem [resolvable:$true] %s733
      %s735 = sshll.u32 %s3, 4
      %s736 = int_to_ptr.hbm [resolvable:$true] %s735
      %741 = dma.vmem_to_hbm [thread:$0]  %s734, 2048, %s736, [#allocation4], 128, 128, 8
    $region29: #{tpu_custom_call.1} parent=1 // pred_fallthru
      _
    // Predicated region
    $region30: #{tpu_custom_call.1} parent=1 // pred_check
      _
    $region31: #{tpu_custom_call.1} parent=1 // pred_check_branch
      %743 = sbr.rel (0) target = $region33
    $region32: #{tpu_custom_call.1} parent=1 // pred_region
      %745 = dma.done [#allocation4], 2048
    $region33: #{tpu_custom_call.1} parent=1 // pred_fallthru
      _
    %746 = vsyncpa [#allocation3], 1
    %747 = vsyncpa [#allocation6], 1
    %748 = vsyncpa [#allocation4], 1

</llo_original>
